<compile_context>
chip_gen: v6e
topology: v6e:2x2x1
jax: 0.10.0
libtpu: 0.0.40
codegen_flags: <defaults>
</compile_context>

<pallas_src>
import jax
import jax.numpy as jnp
from jax.experimental import pallas as pl
from jax.experimental.pallas import tpu as pltpu


def basic_block_kernel(x_ref, band1_ref, g1_ref, b1_ref, band2_ref, g2_ref,
                       b2_ref, o_ref, xp_ref):
    N, H, WC = x_ref.shape            # lane-dense activation: lane = w*C + c
    C = g1_ref.shape[1]
    W = WC // C
    n_red = float(N * H * W)          # BN reduction count per channel

    def conv3x3(band_ref):
        # xp_ref: (N, H+2, W*C) bf16; rows 0 / H+1 are the zero H-halo, the W
        # halo is folded into the banded weights.  3 lane-dense MXU matmuls.
        acc = jnp.zeros((N * H, WC), jnp.float32)
        for dy in range(3):
            rows = xp_ref[:, dy:dy + H, :].reshape(N * H, WC)
            acc = acc + jnp.dot(rows, band_ref[dy],
                                preferred_element_type=jnp.float32)
        return acc                     # (N*H, W*C) f32, lane-dense

    def batchnorm(y, g_ref, b_ref, eps=1e-5):
        # Training-mode BN over N,H,W with a fused per-channel FMA.
        s1 = jnp.sum(y, axis=0, keepdims=True)        # (1, W*C)
        s2 = jnp.sum(y * y, axis=0, keepdims=True)    # (1, W*C)
        ch1 = jnp.zeros((1, C), jnp.float32)          # fold the W lane-groups
        ch2 = jnp.zeros((1, C), jnp.float32)
        for w in range(W):
            ch1 = ch1 + s1[:, w * C:(w + 1) * C]
            ch2 = ch2 + s2[:, w * C:(w + 1) * C]
        mean = ch1 / n_red
        var = ch2 / n_red - mean * mean               # biased variance
        scale = g_ref[...] * jax.lax.rsqrt(var + eps)  # (1, C)
        shift = b_ref[...] - mean * scale              # (1, C)
        scale_l = jnp.concatenate([scale] * W, axis=1)  # (1, W*C) lane pattern
        shift_l = jnp.concatenate([shift] * W, axis=1)
        return y * scale_l + shift_l                   # one FMA per element

    # Zero the padded scratch once (H-halo stays zero; interior overwritten).
    xp_ref[...] = jnp.zeros(xp_ref.shape, xp_ref.dtype)

    # conv1 -> bn1 -> relu
    xp_ref[:, 1:H + 1, :] = x_ref[...].astype(xp_ref.dtype)
    h = jnp.maximum(batchnorm(conv3x3(band1_ref), g1_ref, b1_ref), 0.0)

    # conv2 -> bn2 (scratch + zero halo reused)
    xp_ref[:, 1:H + 1, :] = h.reshape(N, H, WC).astype(xp_ref.dtype)
    h = batchnorm(conv3x3(band2_ref), g2_ref, b2_ref)

    # identity residual (stride=1, no downsample) + relu; re-read x lane-dense.
    out = jnp.maximum(h + x_ref[...].reshape(N * H, WC), 0.0)
    o_ref[...] = out.reshape(N, H, WC).astype(o_ref.dtype)


def _banded_conv_weights(w_hwio, width, dtype=jnp.bfloat16):
    """Expand HWIO (3,3,Cin,Cout) conv weights into 3 block-banded matrices
    (one per kernel row dy) of shape (width*Cin, width*Cout) such that a
    stride-1, pad-1 3x3 conv over a lane-dense row block (N*H, width*Cin) is
        out_rows = sum_dy  rows_shifted_by_dy @ band[dy].
    The zero padding along W is folded into the band (out-of-range taps simply
    have no weight rows)."""
    kh, kw, cin, cout = w_hwio.shape
    assert (kh, kw) == (3, 3), "BasicBlock uses 3x3 convs"
    bands = []
    for dy in range(3):
        b = jnp.zeros((width * cin, width * cout), jnp.float32)
        for dx in range(3):
            # tap dx reads input column (w_out + dx - 1) -> block off-diagonal
            shift = jnp.eye(width, k=1 - dx, dtype=jnp.float32)
            b = b + jnp.kron(shift, w_hwio[dy, dx].astype(jnp.float32))
        bands.append(b)
    return jnp.stack(bands).astype(dtype)     # (3, width*Cin, width*Cout)


@jax.jit
def basic_block(x_nhwc, params):
    """BasicBlock forward, NHWC layout.  x_nhwc: [N, H, W, C] float32.
    (PyTorch NCHW callers should permute once at the model boundary; this
    block does no per-call transposes, only free reshapes.)"""
    w1, g1, b1, w2, g2, b2 = params
    N, H, W, C = x_nhwc.shape
    band1 = _banded_conv_weights(w1, W)       # bf16 MXU weights
    band2 = _banded_conv_weights(w2, W)
    x2 = x_nhwc.reshape(N, H, W * C)          # free, lane-dense view

    vmem = pl.BlockSpec(memory_space=pltpu.MemorySpace.VMEM)
    out = pl.pallas_call(
        basic_block_kernel,
        out_shape=jax.ShapeDtypeStruct((N, H, W * C), x_nhwc.dtype),
        in_specs=[vmem] * 7,
        out_specs=vmem,
        scratch_shapes=[pltpu.VMEM((N, H + 2, W * C), jnp.bfloat16)],
    )(x2, band1, g1, b1, band2, g2, b2)
    return out.reshape(N, H, W, C)


def init_params(key, planes):
    """Deterministic synthetic parameters (shapes follow BasicBlock.__init__).
    Conv weights are HWIO; PyTorch OIHW weights map via transpose(2,3,1,0)."""
    k1, k2, k3, k4 = jax.random.split(key, 4)
    fan_in = planes * 9
    scale = (2.0 / fan_in) ** 0.5
    w1 = jax.random.normal(k1, (3, 3, planes, planes), jnp.float32) * scale
    w2 = jax.random.normal(k2, (3, 3, planes, planes), jnp.float32) * scale
    g1 = 1.0 + 0.1 * jax.random.normal(k3, (1, planes), jnp.float32)
    b1 = 0.1 * jax.random.normal(k4, (1, planes), jnp.float32)
    g2 = jnp.ones((1, planes), jnp.float32)   # fresh BN: gamma=1, beta=0
    b2 = jnp.zeros((1, planes), jnp.float32)
    return (w1, g1, b1, w2, g2, b2)


def basic_block_ref(x_nhwc, params, mxu_dtype=jnp.bfloat16):
    """Pure-JAX reference.  mxu_dtype=bf16 mirrors the kernel's MXU-input
    precision policy; mxu_dtype=f32 is the exact PyTorch-f32 math."""
    w1, g1, b1, w2, g2, b2 = params
    x = x_nhwc.astype(jnp.float32)

    def conv(a, w):
        return jax.lax.conv_general_dilated(
            a.astype(mxu_dtype), w.astype(mxu_dtype),
            window_strides=(1, 1), padding=((1, 1), (1, 1)),
            dimension_numbers=('NHWC', 'HWIO', 'NHWC'),
            preferred_element_type=jnp.float32)

    def bn(a, g, b, eps=1e-5):
        mean = jnp.mean(a, axis=(0, 1, 2), keepdims=True)
        var = jnp.mean(a * a, axis=(0, 1, 2), keepdims=True) - mean * mean
        scale = g.reshape(1, 1, 1, -1) * jax.lax.rsqrt(var + eps)
        shift = b.reshape(1, 1, 1, -1) - mean * scale
        return a * scale + shift

    out = jax.nn.relu(bn(conv(x, w1), g1, b1))
    out = bn(conv(out, w2), g2, b2)
    return jax.nn.relu(out + x)


if __name__ == "__main__":
    key = jax.random.PRNGKey(0)
    kx, kp = jax.random.split(key)

    # inplanes == planes so the shortcut is the identity; W*C = 16*8 = 128
    # makes the whole kernel lane-dense.
    N, H, W, C = 2, 16, 16, 8
    x = jax.random.normal(kx, (N, H, W, C), jnp.float32)
    params = init_params(kp, C)

    out = jax.block_until_ready(basic_block(x, params))
    assert out.shape == (N, H, W, C)

    # Correctness vs a reference with the same numerics policy
    # (bf16 MXU inputs, f32 accumulation, f32 BN / elementwise).
    ref = jax.block_until_ready(basic_block_ref(x, params, jnp.bfloat16))
    err = float(jnp.max(jnp.abs(out - ref)))
    assert jnp.allclose(out, ref, atol=2e-3, rtol=2e-3), err

    # Sanity vs the full-f32 PyTorch math (difference is only bf16 MXU-input
    # rounding).
    ref32 = jax.block_until_ready(basic_block_ref(x, params, jnp.float32))
    err32 = float(jnp.max(jnp.abs(out - ref32)))
    assert jnp.allclose(out, ref32, atol=5e-2, rtol=5e-2), err32

    print("KERNEL_OK")
</pallas_src>

<mosaic_0001>
module attributes {stable_mosaic.version = 11 : i64} {
  func.func @basic_block_kernel(%arg0: memref<2x16x128xf32, #tpu.memory_space<vmem>>, %arg1: memref<3x128x128xbf16, #tpu.memory_space<vmem>>, %arg2: memref<1x8xf32, #tpu.memory_space<vmem>>, %arg3: memref<1x8xf32, #tpu.memory_space<vmem>>, %arg4: memref<3x128x128xbf16, #tpu.memory_space<vmem>>, %arg5: memref<1x8xf32, #tpu.memory_space<vmem>>, %arg6: memref<1x8xf32, #tpu.memory_space<vmem>>, %arg7: memref<2x16x128xf32, #tpu.memory_space<vmem>>, %arg8: memref<2x18x128xbf16, #tpu.memory_space<vmem>>) attributes {dimension_semantics = [], scalar_prefetch = 0 : i64, scratch_operands = 1 : i64, tpu.core_type = #tpu.core_type<tc>} {
    %cst = arith.constant 0.000000e+00 : bf16
    %0 = vector.broadcast %cst : bf16 to vector<2x18x128xbf16>
    %c0 = arith.constant 0 : index
    %c0_0 = arith.constant 0 : index
    %c0_1 = arith.constant 0 : index
    %1 = vector.load %arg8[%c0, %c0_0, %c0_1] : memref<2x18x128xbf16, #tpu.memory_space<vmem>>, vector<2x18x128xbf16>
    tpu.vector_store %arg8[%c0, %c0_0, %c0_1], %0 {strides = array<i32>} : memref<2x18x128xbf16, #tpu.memory_space<vmem>>, vector<2x18x128xbf16>,
    %c0_2 = arith.constant 0 : index
    %c0_3 = arith.constant 0 : index
    %c0_4 = arith.constant 0 : index
    %2 = vector.load %arg0[%c0_2, %c0_3, %c0_4] : memref<2x16x128xf32, #tpu.memory_space<vmem>>, vector<2x16x128xf32>
    %3 = arith.truncf %2 : vector<2x16x128xf32> to vector<2x16x128xbf16>
    %c0_5 = arith.constant 0 : index
    %c1 = arith.constant 1 : index
    %c0_6 = arith.constant 0 : index
    %4 = vector.load %arg8[%c0_5, %c1, %c0_6] : memref<2x18x128xbf16, #tpu.memory_space<vmem>>, vector<2x16x128xbf16>
    tpu.vector_store %arg8[%c0_5, %c1, %c0_6], %3 {strides = array<i32>} : memref<2x18x128xbf16, #tpu.memory_space<vmem>>, vector<2x16x128xbf16>,
    %cst_7 = arith.constant 0.000000e+00 : f32
    %5 = vector.broadcast %cst_7 : f32 to vector<32x128xf32>
    %c0_8 = arith.constant 0 : index
    %c0_9 = arith.constant 0 : index
    %c0_10 = arith.constant 0 : index
    %6 = vector.load %arg8[%c0_8, %c0_9, %c0_10] : memref<2x18x128xbf16, #tpu.memory_space<vmem>>, vector<2x16x128xbf16>
    %7 = vector.shape_cast %6 : vector<2x16x128xbf16> to vector<32x128xbf16>
    %c0_11 = arith.constant 0 : index
    %c0_12 = arith.constant 0 : index
    %c0_13 = arith.constant 0 : index
    %8 = vector.load %arg1[%c0_11, %c0_12, %c0_13] : memref<3x128x128xbf16, #tpu.memory_space<vmem>>, vector<1x128x128xbf16>
    %9 = vector.shape_cast %8 : vector<1x128x128xbf16> to vector<128x128xbf16>
    %cst_14 = arith.constant dense<0.000000e+00> : vector<32x128xf32>
    %10 = tpu.matmul %7, %9, %cst_14 {dimension_numbers = #tpu.dot_dimension_numbers<[1], [0], [0], [1], [0, 0, 1, 1], [], []>} : vector<32x128xbf16>, vector<128x128xbf16>, vector<32x128xf32> -> vector<32x128xf32>
    %11 = arith.addf %5, %10 : vector<32x128xf32>
    %c0_15 = arith.constant 0 : index
    %c1_16 = arith.constant 1 : index
    %c0_17 = arith.constant 0 : index
    %12 = vector.load %arg8[%c0_15, %c1_16, %c0_17] : memref<2x18x128xbf16, #tpu.memory_space<vmem>>, vector<2x16x128xbf16>
    %13 = vector.shape_cast %12 : vector<2x16x128xbf16> to vector<32x128xbf16>
    %c1_18 = arith.constant 1 : index
    %c0_19 = arith.constant 0 : index
    %c0_20 = arith.constant 0 : index
    %14 = vector.load %arg1[%c1_18, %c0_19, %c0_20] : memref<3x128x128xbf16, #tpu.memory_space<vmem>>, vector<1x128x128xbf16>
    %15 = vector.shape_cast %14 : vector<1x128x128xbf16> to vector<128x128xbf16>
    %cst_21 = arith.constant dense<0.000000e+00> : vector<32x128xf32>
    %16 = tpu.matmul %13, %15, %cst_21 {dimension_numbers = #tpu.dot_dimension_numbers<[1], [0], [0], [1], [0, 0, 1, 1], [], []>} : vector<32x128xbf16>, vector<128x128xbf16>, vector<32x128xf32> -> vector<32x128xf32>
    %17 = arith.addf %11, %16 : vector<32x128xf32>
    %c0_22 = arith.constant 0 : index
    %c2 = arith.constant 2 : index
    %c0_23 = arith.constant 0 : index
    %18 = vector.load %arg8[%c0_22, %c2, %c0_23] : memref<2x18x128xbf16, #tpu.memory_space<vmem>>, vector<2x16x128xbf16>
    %19 = vector.shape_cast %18 : vector<2x16x128xbf16> to vector<32x128xbf16>
    %c2_24 = arith.constant 2 : index
    %c0_25 = arith.constant 0 : index
    %c0_26 = arith.constant 0 : index
    %20 = vector.load %arg1[%c2_24, %c0_25, %c0_26] : memref<3x128x128xbf16, #tpu.memory_space<vmem>>, vector<1x128x128xbf16>
    %21 = vector.shape_cast %20 : vector<1x128x128xbf16> to vector<128x128xbf16>
    %cst_27 = arith.constant dense<0.000000e+00> : vector<32x128xf32>
    %22 = tpu.matmul %19, %21, %cst_27 {dimension_numbers = #tpu.dot_dimension_numbers<[1], [0], [0], [1], [0, 0, 1, 1], [], []>} : vector<32x128xbf16>, vector<128x128xbf16>, vector<32x128xf32> -> vector<32x128xf32>
    %23 = arith.addf %17, %22 : vector<32x128xf32>
    %cst_28 = arith.constant dense<0.000000e+00> : vector<128xf32>
    %24 = vector.multi_reduction <add>, %23, %cst_28 [0] : vector<32x128xf32> to vector<128xf32>
    %25 = vector.shape_cast %24 : vector<128xf32> to vector<1x128xf32>
    %26 = arith.mulf %23, %23 : vector<32x128xf32>
    %cst_29 = arith.constant dense<0.000000e+00> : vector<128xf32>
    %27 = vector.multi_reduction <add>, %26, %cst_29 [0] : vector<32x128xf32> to vector<128xf32>
    %28 = vector.shape_cast %27 : vector<128xf32> to vector<1x128xf32>
    %cst_30 = arith.constant 0.000000e+00 : f32
    %29 = vector.broadcast %cst_30 : f32 to vector<1x8xf32>
    %cst_31 = arith.constant 0.000000e+00 : f32
    %30 = vector.broadcast %cst_31 : f32 to vector<1x8xf32>
    %31 = vector.extract_strided_slice %25 {offsets = [0, 0], sizes = [1, 8], strides = [1, 1]} : vector<1x128xf32> to vector<1x8xf32>
    %32 = arith.addf %29, %31 : vector<1x8xf32>
    %33 = vector.extract_strided_slice %28 {offsets = [0, 0], sizes = [1, 8], strides = [1, 1]} : vector<1x128xf32> to vector<1x8xf32>
    %34 = arith.addf %30, %33 : vector<1x8xf32>
    %35 = vector.extract_strided_slice %25 {offsets = [0, 8], sizes = [1, 8], strides = [1, 1]} : vector<1x128xf32> to vector<1x8xf32>
    %36 = arith.addf %32, %35 : vector<1x8xf32>
    %37 = vector.extract_strided_slice %28 {offsets = [0, 8], sizes = [1, 8], strides = [1, 1]} : vector<1x128xf32> to vector<1x8xf32>
    %38 = arith.addf %34, %37 : vector<1x8xf32>
    %39 = vector.extract_strided_slice %25 {offsets = [0, 16], sizes = [1, 8], strides = [1, 1]} : vector<1x128xf32> to vector<1x8xf32>
    %40 = arith.addf %36, %39 : vector<1x8xf32>
    %41 = vector.extract_strided_slice %28 {offsets = [0, 16], sizes = [1, 8], strides = [1, 1]} : vector<1x128xf32> to vector<1x8xf32>
    %42 = arith.addf %38, %41 : vector<1x8xf32>
    %43 = vector.extract_strided_slice %25 {offsets = [0, 24], sizes = [1, 8], strides = [1, 1]} : vector<1x128xf32> to vector<1x8xf32>
    %44 = arith.addf %40, %43 : vector<1x8xf32>
    %45 = vector.extract_strided_slice %28 {offsets = [0, 24], sizes = [1, 8], strides = [1, 1]} : vector<1x128xf32> to vector<1x8xf32>
    %46 = arith.addf %42, %45 : vector<1x8xf32>
    %47 = vector.extract_strided_slice %25 {offsets = [0, 32], sizes = [1, 8], strides = [1, 1]} : vector<1x128xf32> to vector<1x8xf32>
    %48 = arith.addf %44, %47 : vector<1x8xf32>
    %49 = vector.extract_strided_slice %28 {offsets = [0, 32], sizes = [1, 8], strides = [1, 1]} : vector<1x128xf32> to vector<1x8xf32>
    %50 = arith.addf %46, %49 : vector<1x8xf32>
    %51 = vector.extract_strided_slice %25 {offsets = [0, 40], sizes = [1, 8], strides = [1, 1]} : vector<1x128xf32> to vector<1x8xf32>
    %52 = arith.addf %48, %51 : vector<1x8xf32>
    %53 = vector.extract_strided_slice %28 {offsets = [0, 40], sizes = [1, 8], strides = [1, 1]} : vector<1x128xf32> to vector<1x8xf32>
    %54 = arith.addf %50, %53 : vector<1x8xf32>
    %55 = vector.extract_strided_slice %25 {offsets = [0, 48], sizes = [1, 8], strides = [1, 1]} : vector<1x128xf32> to vector<1x8xf32>
    %56 = arith.addf %52, %55 : vector<1x8xf32>
    %57 = vector.extract_strided_slice %28 {offsets = [0, 48], sizes = [1, 8], strides = [1, 1]} : vector<1x128xf32> to vector<1x8xf32>
    %58 = arith.addf %54, %57 : vector<1x8xf32>
    %59 = vector.extract_strided_slice %25 {offsets = [0, 56], sizes = [1, 8], strides = [1, 1]} : vector<1x128xf32> to vector<1x8xf32>
    %60 = arith.addf %56, %59 : vector<1x8xf32>
    %61 = vector.extract_strided_slice %28 {offsets = [0, 56], sizes = [1, 8], strides = [1, 1]} : vector<1x128xf32> to vector<1x8xf32>
    %62 = arith.addf %58, %61 : vector<1x8xf32>
    %63 = vector.extract_strided_slice %25 {offsets = [0, 64], sizes = [1, 8], strides = [1, 1]} : vector<1x128xf32> to vector<1x8xf32>
    %64 = arith.addf %60, %63 : vector<1x8xf32>
    %65 = vector.extract_strided_slice %28 {offsets = [0, 64], sizes = [1, 8], strides = [1, 1]} : vector<1x128xf32> to vector<1x8xf32>
    %66 = arith.addf %62, %65 : vector<1x8xf32>
    %67 = vector.extract_strided_slice %25 {offsets = [0, 72], sizes = [1, 8], strides = [1, 1]} : vector<1x128xf32> to vector<1x8xf32>
    %68 = arith.addf %64, %67 : vector<1x8xf32>
    %69 = vector.extract_strided_slice %28 {offsets = [0, 72], sizes = [1, 8], strides = [1, 1]} : vector<1x128xf32> to vector<1x8xf32>
    %70 = arith.addf %66, %69 : vector<1x8xf32>
    %71 = vector.extract_strided_slice %25 {offsets = [0, 80], sizes = [1, 8], strides = [1, 1]} : vector<1x128xf32> to vector<1x8xf32>
    %72 = arith.addf %68, %71 : vector<1x8xf32>
    %73 = vector.extract_strided_slice %28 {offsets = [0, 80], sizes = [1, 8], strides = [1, 1]} : vector<1x128xf32> to vector<1x8xf32>
    %74 = arith.addf %70, %73 : vector<1x8xf32>
    %75 = vector.extract_strided_slice %25 {offsets = [0, 88], sizes = [1, 8], strides = [1, 1]} : vector<1x128xf32> to vector<1x8xf32>
    %76 = arith.addf %72, %75 : vector<1x8xf32>
    %77 = vector.extract_strided_slice %28 {offsets = [0, 88], sizes = [1, 8], strides = [1, 1]} : vector<1x128xf32> to vector<1x8xf32>
    %78 = arith.addf %74, %77 : vector<1x8xf32>
    %79 = vector.extract_strided_slice %25 {offsets = [0, 96], sizes = [1, 8], strides = [1, 1]} : vector<1x128xf32> to vector<1x8xf32>
    %80 = arith.addf %76, %79 : vector<1x8xf32>
    %81 = vector.extract_strided_slice %28 {offsets = [0, 96], sizes = [1, 8], strides = [1, 1]} : vector<1x128xf32> to vector<1x8xf32>
    %82 = arith.addf %78, %81 : vector<1x8xf32>
    %83 = vector.extract_strided_slice %25 {offsets = [0, 104], sizes = [1, 8], strides = [1, 1]} : vector<1x128xf32> to vector<1x8xf32>
    %84 = arith.addf %80, %83 : vector<1x8xf32>
    %85 = vector.extract_strided_slice %28 {offsets = [0, 104], sizes = [1, 8], strides = [1, 1]} : vector<1x128xf32> to vector<1x8xf32>
    %86 = arith.addf %82, %85 : vector<1x8xf32>
    %87 = vector.extract_strided_slice %25 {offsets = [0, 112], sizes = [1, 8], strides = [1, 1]} : vector<1x128xf32> to vector<1x8xf32>
    %88 = arith.addf %84, %87 : vector<1x8xf32>
    %89 = vector.extract_strided_slice %28 {offsets = [0, 112], sizes = [1, 8], strides = [1, 1]} : vector<1x128xf32> to vector<1x8xf32>
    %90 = arith.addf %86, %89 : vector<1x8xf32>
    %91 = vector.extract_strided_slice %25 {offsets = [0, 120], sizes = [1, 8], strides = [1, 1]} : vector<1x128xf32> to vector<1x8xf32>
    %92 = arith.addf %88, %91 : vector<1x8xf32>
    %93 = vector.extract_strided_slice %28 {offsets = [0, 120], sizes = [1, 8], strides = [1, 1]} : vector<1x128xf32> to vector<1x8xf32>
    %94 = arith.addf %90, %93 : vector<1x8xf32>
    %cst_32 = arith.constant 5.120000e+02 : f32
    %95 = vector.broadcast %cst_32 : f32 to vector<1x8xf32>
    %96 = arith.divf %92, %95 : vector<1x8xf32>
    %cst_33 = arith.constant 5.120000e+02 : f32
    %97 = vector.broadcast %cst_33 : f32 to vector<1x8xf32>
    %98 = arith.divf %94, %97 : vector<1x8xf32>
    %99 = arith.mulf %96, %96 : vector<1x8xf32>
    %100 = arith.subf %98, %99 : vector<1x8xf32>
    %c0_34 = arith.constant 0 : index
    %c0_35 = arith.constant 0 : index
    %101 = vector.load %arg2[%c0_34, %c0_35] : memref<1x8xf32, #tpu.memory_space<vmem>>, vector<1x8xf32>
    %cst_36 = arith.constant 9.99999974E-6 : f32
    %102 = vector.broadcast %cst_36 : f32 to vector<1x8xf32>
    %103 = arith.addf %100, %102 : vector<1x8xf32>
    %104 = math.rsqrt %103 : vector<1x8xf32>
    %105 = arith.mulf %101, %104 : vector<1x8xf32>
    %c0_37 = arith.constant 0 : index
    %c0_38 = arith.constant 0 : index
    %106 = vector.load %arg3[%c0_37, %c0_38] : memref<1x8xf32, #tpu.memory_space<vmem>>, vector<1x8xf32>
    %107 = arith.mulf %96, %105 : vector<1x8xf32>
    %108 = arith.subf %106, %107 : vector<1x8xf32>
    %109 = tpu.concatenate %105, %105, %105, %105, %105, %105, %105, %105, %105, %105, %105, %105, %105, %105, %105, %105 in 1 : vector<1x8xf32>, vector<1x8xf32>, vector<1x8xf32>, vector<1x8xf32>, vector<1x8xf32>, vector<1x8xf32>, vector<1x8xf32>, vector<1x8xf32>, vector<1x8xf32>, vector<1x8xf32>, vector<1x8xf32>, vector<1x8xf32>, vector<1x8xf32>, vector<1x8xf32>, vector<1x8xf32>, vector<1x8xf32> -> vector<1x128xf32>
    %110 = tpu.concatenate %108, %108, %108, %108, %108, %108, %108, %108, %108, %108, %108, %108, %108, %108, %108, %108 in 1 : vector<1x8xf32>, vector<1x8xf32>, vector<1x8xf32>, vector<1x8xf32>, vector<1x8xf32>, vector<1x8xf32>, vector<1x8xf32>, vector<1x8xf32>, vector<1x8xf32>, vector<1x8xf32>, vector<1x8xf32>, vector<1x8xf32>, vector<1x8xf32>, vector<1x8xf32>, vector<1x8xf32>, vector<1x8xf32> -> vector<1x128xf32>
    %111 = vector.broadcast %109 : vector<1x128xf32> to vector<32x128xf32>
    %112 = arith.mulf %23, %111 : vector<32x128xf32>
    %113 = vector.broadcast %110 : vector<1x128xf32> to vector<32x128xf32>
    %114 = arith.addf %112, %113 : vector<32x128xf32>
    %cst_39 = arith.constant 0.000000e+00 : f32
    %115 = vector.broadcast %cst_39 : f32 to vector<32x128xf32>
    %116 = arith.maximumf %114, %115 : vector<32x128xf32>
    %117 = vector.shape_cast %116 : vector<32x128xf32> to vector<2x16x128xf32>
    %118 = arith.truncf %117 : vector<2x16x128xf32> to vector<2x16x128xbf16>
    %c0_40 = arith.constant 0 : index
    %c1_41 = arith.constant 1 : index
    %c0_42 = arith.constant 0 : index
    %119 = vector.load %arg8[%c0_40, %c1_41, %c0_42] : memref<2x18x128xbf16, #tpu.memory_space<vmem>>, vector<2x16x128xbf16>
    tpu.vector_store %arg8[%c0_40, %c1_41, %c0_42], %118 {strides = array<i32>} : memref<2x18x128xbf16, #tpu.memory_space<vmem>>, vector<2x16x128xbf16>,
    %cst_43 = arith.constant 0.000000e+00 : f32
    %120 = vector.broadcast %cst_43 : f32 to vector<32x128xf32>
    %c0_44 = arith.constant 0 : index
    %c0_45 = arith.constant 0 : index
    %c0_46 = arith.constant 0 : index
    %121 = vector.load %arg8[%c0_44, %c0_45, %c0_46] : memref<2x18x128xbf16, #tpu.memory_space<vmem>>, vector<2x16x128xbf16>
    %122 = vector.shape_cast %121 : vector<2x16x128xbf16> to vector<32x128xbf16>
    %c0_47 = arith.constant 0 : index
    %c0_48 = arith.constant 0 : index
    %c0_49 = arith.constant 0 : index
    %123 = vector.load %arg4[%c0_47, %c0_48, %c0_49] : memref<3x128x128xbf16, #tpu.memory_space<vmem>>, vector<1x128x128xbf16>
    %124 = vector.shape_cast %123 : vector<1x128x128xbf16> to vector<128x128xbf16>
    %cst_50 = arith.constant dense<0.000000e+00> : vector<32x128xf32>
    %125 = tpu.matmul %122, %124, %cst_50 {dimension_numbers = #tpu.dot_dimension_numbers<[1], [0], [0], [1], [0, 0, 1, 1], [], []>} : vector<32x128xbf16>, vector<128x128xbf16>, vector<32x128xf32> -> vector<32x128xf32>
    %126 = arith.addf %120, %125 : vector<32x128xf32>
    %c0_51 = arith.constant 0 : index
    %c1_52 = arith.constant 1 : index
    %c0_53 = arith.constant 0 : index
    %127 = vector.load %arg8[%c0_51, %c1_52, %c0_53] : memref<2x18x128xbf16, #tpu.memory_space<vmem>>, vector<2x16x128xbf16>
    %128 = vector.shape_cast %127 : vector<2x16x128xbf16> to vector<32x128xbf16>
    %c1_54 = arith.constant 1 : index
    %c0_55 = arith.constant 0 : index
    %c0_56 = arith.constant 0 : index
    %129 = vector.load %arg4[%c1_54, %c0_55, %c0_56] : memref<3x128x128xbf16, #tpu.memory_space<vmem>>, vector<1x128x128xbf16>
    %130 = vector.shape_cast %129 : vector<1x128x128xbf16> to vector<128x128xbf16>
    %cst_57 = arith.constant dense<0.000000e+00> : vector<32x128xf32>
    %131 = tpu.matmul %128, %130, %cst_57 {dimension_numbers = #tpu.dot_dimension_numbers<[1], [0], [0], [1], [0, 0, 1, 1], [], []>} : vector<32x128xbf16>, vector<128x128xbf16>, vector<32x128xf32> -> vector<32x128xf32>
    %132 = arith.addf %126, %131 : vector<32x128xf32>
    %c0_58 = arith.constant 0 : index
    %c2_59 = arith.constant 2 : index
    %c0_60 = arith.constant 0 : index
    %133 = vector.load %arg8[%c0_58, %c2_59, %c0_60] : memref<2x18x128xbf16, #tpu.memory_space<vmem>>, vector<2x16x128xbf16>
    %134 = vector.shape_cast %133 : vector<2x16x128xbf16> to vector<32x128xbf16>
    %c2_61 = arith.constant 2 : index
    %c0_62 = arith.constant 0 : index
    %c0_63 = arith.constant 0 : index
    %135 = vector.load %arg4[%c2_61, %c0_62, %c0_63] : memref<3x128x128xbf16, #tpu.memory_space<vmem>>, vector<1x128x128xbf16>
    %136 = vector.shape_cast %135 : vector<1x128x128xbf16> to vector<128x128xbf16>
    %cst_64 = arith.constant dense<0.000000e+00> : vector<32x128xf32>
    %137 = tpu.matmul %134, %136, %cst_64 {dimension_numbers = #tpu.dot_dimension_numbers<[1], [0], [0], [1], [0, 0, 1, 1], [], []>} : vector<32x128xbf16>, vector<128x128xbf16>, vector<32x128xf32> -> vector<32x128xf32>
    %138 = arith.addf %132, %137 : vector<32x128xf32>
    %cst_65 = arith.constant dense<0.000000e+00> : vector<128xf32>
    %139 = vector.multi_reduction <add>, %138, %cst_65 [0] : vector<32x128xf32> to vector<128xf32>
    %140 = vector.shape_cast %139 : vector<128xf32> to vector<1x128xf32>
    %141 = arith.mulf %138, %138 : vector<32x128xf32>
    %cst_66 = arith.constant dense<0.000000e+00> : vector<128xf32>
    %142 = vector.multi_reduction <add>, %141, %cst_66 [0] : vector<32x128xf32> to vector<128xf32>
    %143 = vector.shape_cast %142 : vector<128xf32> to vector<1x128xf32>
    %cst_67 = arith.constant 0.000000e+00 : f32
    %144 = vector.broadcast %cst_67 : f32 to vector<1x8xf32>
    %cst_68 = arith.constant 0.000000e+00 : f32
    %145 = vector.broadcast %cst_68 : f32 to vector<1x8xf32>
    %146 = vector.extract_strided_slice %140 {offsets = [0, 0], sizes = [1, 8], strides = [1, 1]} : vector<1x128xf32> to vector<1x8xf32>
    %147 = arith.addf %144, %146 : vector<1x8xf32>
    %148 = vector.extract_strided_slice %143 {offsets = [0, 0], sizes = [1, 8], strides = [1, 1]} : vector<1x128xf32> to vector<1x8xf32>
    %149 = arith.addf %145, %148 : vector<1x8xf32>
    %150 = vector.extract_strided_slice %140 {offsets = [0, 8], sizes = [1, 8], strides = [1, 1]} : vector<1x128xf32> to vector<1x8xf32>
    %151 = arith.addf %147, %150 : vector<1x8xf32>
    %152 = vector.extract_strided_slice %143 {offsets = [0, 8], sizes = [1, 8], strides = [1, 1]} : vector<1x128xf32> to vector<1x8xf32>
    %153 = arith.addf %149, %152 : vector<1x8xf32>
    %154 = vector.extract_strided_slice %140 {offsets = [0, 16], sizes = [1, 8], strides = [1, 1]} : vector<1x128xf32> to vector<1x8xf32>
    %155 = arith.addf %151, %154 : vector<1x8xf32>
    %156 = vector.extract_strided_slice %143 {offsets = [0, 16], sizes = [1, 8], strides = [1, 1]} : vector<1x128xf32> to vector<1x8xf32>
    %157 = arith.addf %153, %156 : vector<1x8xf32>
    %158 = vector.extract_strided_slice %140 {offsets = [0, 24], sizes = [1, 8], strides = [1, 1]} : vector<1x128xf32> to vector<1x8xf32>
    %159 = arith.addf %155, %158 : vector<1x8xf32>
    %160 = vector.extract_strided_slice %143 {offsets = [0, 24], sizes = [1, 8], strides = [1, 1]} : vector<1x128xf32> to vector<1x8xf32>
    %161 = arith.addf %157, %160 : vector<1x8xf32>
    %162 = vector.extract_strided_slice %140 {offsets = [0, 32], sizes = [1, 8], strides = [1, 1]} : vector<1x128xf32> to vector<1x8xf32>
    %163 = arith.addf %159, %162 : vector<1x8xf32>
    %164 = vector.extract_strided_slice %143 {offsets = [0, 32], sizes = [1, 8], strides = [1, 1]} : vector<1x128xf32> to vector<1x8xf32>
    %165 = arith.addf %161, %164 : vector<1x8xf32>
    %166 = vector.extract_strided_slice %140 {offsets = [0, 40], sizes = [1, 8], strides = [1, 1]} : vector<1x128xf32> to vector<1x8xf32>
    %167 = arith.addf %163, %166 : vector<1x8xf32>
    %168 = vector.extract_strided_slice %143 {offsets = [0, 40], sizes = [1, 8], strides = [1, 1]} : vector<1x128xf32> to vector<1x8xf32>
    %169 = arith.addf %165, %168 : vector<1x8xf32>
    %170 = vector.extract_strided_slice %140 {offsets = [0, 48], sizes = [1, 8], strides = [1, 1]} : vector<1x128xf32> to vector<1x8xf32>
    %171 = arith.addf %167, %170 : vector<1x8xf32>
    %172 = vector.extract_strided_slice %143 {offsets = [0, 48], sizes = [1, 8], strides = [1, 1]} : vector<1x128xf32> to vector<1x8xf32>
    %173 = arith.addf %169, %172 : vector<1x8xf32>
    %174 = vector.extract_strided_slice %140 {offsets = [0, 56], sizes = [1, 8], strides = [1, 1]} : vector<1x128xf32> to vector<1x8xf32>
    %175 = arith.addf %171, %174 : vector<1x8xf32>
    %176 = vector.extract_strided_slice %143 {offsets = [0, 56], sizes = [1, 8], strides = [1, 1]} : vector<1x128xf32> to vector<1x8xf32>
    %177 = arith.addf %173, %176 : vector<1x8xf32>
    %178 = vector.extract_strided_slice %140 {offsets = [0, 64], sizes = [1, 8], strides = [1, 1]} : vector<1x128xf32> to vector<1x8xf32>
    %179 = arith.addf %175, %178 : vector<1x8xf32>
    %180 = vector.extract_strided_slice %143 {offsets = [0, 64], sizes = [1, 8], strides = [1, 1]} : vector<1x128xf32> to vector<1x8xf32>
    %181 = arith.addf %177, %180 : vector<1x8xf32>
    %182 = vector.extract_strided_slice %140 {offsets = [0, 72], sizes = [1, 8], strides = [1, 1]} : vector<1x128xf32> to vector<1x8xf32>
    %183 = arith.addf %179, %182 : vector<1x8xf32>
    %184 = vector.extract_strided_slice %143 {offsets = [0, 72], sizes = [1, 8], strides = [1, 1]} : vector<1x128xf32> to vector<1x8xf32>
    %185 = arith.addf %181, %184 : vector<1x8xf32>
    %186 = vector.extract_strided_slice %140 {offsets = [0, 80], sizes = [1, 8], strides = [1, 1]} : vector<1x128xf32> to vector<1x8xf32>
    %187 = arith.addf %183, %186 : vector<1x8xf32>
    %188 = vector.extract_strided_slice %143 {offsets = [0, 80], sizes = [1, 8], strides = [1, 1]} : vector<1x128xf32> to vector<1x8xf32>
    %189 = arith.addf %185, %188 : vector<1x8xf32>
    %190 = vector.extract_strided_slice %140 {offsets = [0, 88], sizes = [1, 8], strides = [1, 1]} : vector<1x128xf32> to vector<1x8xf32>
    %191 = arith.addf %187, %190 : vector<1x8xf32>
    %192 = vector.extract_strided_slice %143 {offsets = [0, 88], sizes = [1, 8], strides = [1, 1]} : vector<1x128xf32> to vector<1x8xf32>
    %193 = arith.addf %189, %192 : vector<1x8xf32>
    %194 = vector.extract_strided_slice %140 {offsets = [0, 96], sizes = [1, 8], strides = [1, 1]} : vector<1x128xf32> to vector<1x8xf32>
    %195 = arith.addf %191, %194 : vector<1x8xf32>
    %196 = vector.extract_strided_slice %143 {offsets = [0, 96], sizes = [1, 8], strides = [1, 1]} : vector<1x128xf32> to vector<1x8xf32>
    %197 = arith.addf %193, %196 : vector<1x8xf32>
    %198 = vector.extract_strided_slice %140 {offsets = [0, 104], sizes = [1, 8], strides = [1, 1]} : vector<1x128xf32> to vector<1x8xf32>
    %199 = arith.addf %195, %198 : vector<1x8xf32>
    %200 = vector.extract_strided_slice %143 {offsets = [0, 104], sizes = [1, 8], strides = [1, 1]} : vector<1x128xf32> to vector<1x8xf32>
    %201 = arith.addf %197, %200 : vector<1x8xf32>
    %202 = vector.extract_strided_slice %140 {offsets = [0, 112], sizes = [1, 8], strides = [1, 1]} : vector<1x128xf32> to vector<1x8xf32>
    %203 = arith.addf %199, %202 : vector<1x8xf32>
    %204 = vector.extract_strided_slice %143 {offsets = [0, 112], sizes = [1, 8], strides = [1, 1]} : vector<1x128xf32> to vector<1x8xf32>
    %205 = arith.addf %201, %204 : vector<1x8xf32>
    %206 = vector.extract_strided_slice %140 {offsets = [0, 120], sizes = [1, 8], strides = [1, 1]} : vector<1x128xf32> to vector<1x8xf32>
    %207 = arith.addf %203, %206 : vector<1x8xf32>
    %208 = vector.extract_strided_slice %143 {offsets = [0, 120], sizes = [1, 8], strides = [1, 1]} : vector<1x128xf32> to vector<1x8xf32>
    %209 = arith.addf %205, %208 : vector<1x8xf32>
    %cst_69 = arith.constant 5.120000e+02 : f32
    %210 = vector.broadcast %cst_69 : f32 to vector<1x8xf32>
    %211 = arith.divf %207, %210 : vector<1x8xf32>
    %cst_70 = arith.constant 5.120000e+02 : f32
    %212 = vector.broadcast %cst_70 : f32 to vector<1x8xf32>
    %213 = arith.divf %209, %212 : vector<1x8xf32>
    %214 = arith.mulf %211, %211 : vector<1x8xf32>
    %215 = arith.subf %213, %214 : vector<1x8xf32>
    %c0_71 = arith.constant 0 : index
    %c0_72 = arith.constant 0 : index
    %216 = vector.load %arg5[%c0_71, %c0_72] : memref<1x8xf32, #tpu.memory_space<vmem>>, vector<1x8xf32>
    %cst_73 = arith.constant 9.99999974E-6 : f32
    %217 = vector.broadcast %cst_73 : f32 to vector<1x8xf32>
    %218 = arith.addf %215, %217 : vector<1x8xf32>
    %219 = math.rsqrt %218 : vector<1x8xf32>
    %220 = arith.mulf %216, %219 : vector<1x8xf32>
    %c0_74 = arith.constant 0 : index
    %c0_75 = arith.constant 0 : index
    %221 = vector.load %arg6[%c0_74, %c0_75] : memref<1x8xf32, #tpu.memory_space<vmem>>, vector<1x8xf32>
    %222 = arith.mulf %211, %220 : vector<1x8xf32>
    %223 = arith.subf %221, %222 : vector<1x8xf32>
    %224 = tpu.concatenate %220, %220, %220, %220, %220, %220, %220, %220, %220, %220, %220, %220, %220, %220, %220, %220 in 1 : vector<1x8xf32>, vector<1x8xf32>, vector<1x8xf32>, vector<1x8xf32>, vector<1x8xf32>, vector<1x8xf32>, vector<1x8xf32>, vector<1x8xf32>, vector<1x8xf32>, vector<1x8xf32>, vector<1x8xf32>, vector<1x8xf32>, vector<1x8xf32>, vector<1x8xf32>, vector<1x8xf32>, vector<1x8xf32> -> vector<1x128xf32>
    %225 = tpu.concatenate %223, %223, %223, %223, %223, %223, %223, %223, %223, %223, %223, %223, %223, %223, %223, %223 in 1 : vector<1x8xf32>, vector<1x8xf32>, vector<1x8xf32>, vector<1x8xf32>, vector<1x8xf32>, vector<1x8xf32>, vector<1x8xf32>, vector<1x8xf32>, vector<1x8xf32>, vector<1x8xf32>, vector<1x8xf32>, vector<1x8xf32>, vector<1x8xf32>, vector<1x8xf32>, vector<1x8xf32>, vector<1x8xf32> -> vector<1x128xf32>
    %226 = vector.broadcast %224 : vector<1x128xf32> to vector<32x128xf32>
    %227 = arith.mulf %138, %226 : vector<32x128xf32>
    %228 = vector.broadcast %225 : vector<1x128xf32> to vector<32x128xf32>
    %229 = arith.addf %227, %228 : vector<32x128xf32>
    %c0_76 = arith.constant 0 : index
    %c0_77 = arith.constant 0 : index
    %c0_78 = arith.constant 0 : index
    %230 = vector.load %arg0[%c0_76, %c0_77, %c0_78] : memref<2x16x128xf32, #tpu.memory_space<vmem>>, vector<2x16x128xf32>
    %231 = vector.shape_cast %230 : vector<2x16x128xf32> to vector<32x128xf32>
    %232 = arith.addf %229, %231 : vector<32x128xf32>
    %cst_79 = arith.constant 0.000000e+00 : f32
    %233 = vector.broadcast %cst_79 : f32 to vector<32x128xf32>
    %234 = arith.maximumf %232, %233 : vector<32x128xf32>
    %235 = vector.shape_cast %234 : vector<32x128xf32> to vector<2x16x128xf32>
    %c0_80 = arith.constant 0 : index
    %c0_81 = arith.constant 0 : index
    %c0_82 = arith.constant 0 : index
    %236 = vector.load %arg7[%c0_80, %c0_81, %c0_82] : memref<2x16x128xf32, #tpu.memory_space<vmem>>, vector<2x16x128xf32>
    tpu.vector_store %arg7[%c0_80, %c0_81, %c0_82], %235 {strides = array<i32>} : memref<2x16x128xf32, #tpu.memory_space<vmem>>, vector<2x16x128xf32>,
    return
  }
}

</mosaic_0001>

<llo_original>
// kernel: basic_block.1
$region0: #{basic_block.1}
  #allocation0 [shape = 'u32[]', space=smem, size = 0x4, offset = 0x4, fixed_abs, tag = 'smem constant byte address 0x4 - core index']
  #allocation1 [shape = 'u32[144,128]{1,0:T(1,128)}', space=vmem, size = 0x12000, scoped, tag = 'internal scratch']
  #allocation2 [shape = 'bf16[2,18,128]{2,1,0:T(8,128)(2,1)}', space=vmem, size = 0x3000, scoped, tag = 'scratch operand']
  %s0 = inlined_call_operand.vmem [shape: f32[2,16,128], index: 0, kind: input, shape index: {}]
  %s1 = inlined_call_operand.vmem [shape: bf16[3,128,128], index: 1, kind: input, shape index: {}]
  %s2 = inlined_call_operand.vmem [shape: f32[1,8], index: 2, kind: input, shape index: {}]
  %s3 = inlined_call_operand.vmem [shape: f32[1,8], index: 3, kind: input, shape index: {}]
  %s4 = inlined_call_operand.vmem [shape: bf16[3,128,128], index: 4, kind: input, shape index: {}]
  %s5 = inlined_call_operand.vmem [shape: f32[1,8], index: 5, kind: input, shape index: {}]
  %s6 = inlined_call_operand.vmem [shape: f32[1,8], index: 6, kind: input, shape index: {}]
  %s7 = inlined_call_operand.vmem [shape: f32[2,16,128], index: 7, kind: output, shape index: {}]
  %s8 = sld [smem:[#allocation0]]
  $region38: #{basic_block.1} parent=0
    _
  %s10 = ssub.s32 1, %s8
  %s11 = scalar_select 0, %s10, %s8
  // Predicated region
  $region2: #{basic_block.1} parent=0 // pred_check
    _
  $region3: #{basic_block.1} parent=0 // pred_check_branch
    %13 = sbr.rel (0) target = $region5
  $region4: #{basic_block.1} parent=0 // pred_region
    _
  $region5: #{basic_block.1} parent=0 // pred_fallthru
    _
  // Predicated region
  $region6: #{basic_block.1} parent=0 // pred_check
    _
  $region7: #{basic_block.1} parent=0 // pred_check_branch
    %15 = sbr.rel (0) target = $region9
  $region8: #{basic_block.1} parent=0 // pred_region
    _
  $region9: #{basic_block.1} parent=0 // pred_fallthru
    _
  // Predicated region
  $region10: #{basic_block.1} parent=0 // pred_check
    _
  $region11: #{basic_block.1} parent=0 // pred_check_branch
    %17 = sbr.rel (0) target = $region13
  $region12: #{basic_block.1} parent=0 // pred_region
    _
  $region13: #{basic_block.1} parent=0 // pred_fallthru
    _
  // Predicated region
  $region14: #{basic_block.1} parent=0 // pred_check
    _
  $region15: #{basic_block.1} parent=0 // pred_check_branch
    %19 = sbr.rel (0) target = $region17
  $region16: #{basic_block.1} parent=0 // pred_region
    _
  $region17: #{basic_block.1} parent=0 // pred_fallthru
    _
  // Predicated region
  $region18: #{basic_block.1} parent=0 // pred_check
    _
  $region19: #{basic_block.1} parent=0 // pred_check_branch
    %21 = sbr.rel (0) target = $region21
  $region20: #{basic_block.1} parent=0 // pred_region
    _
  $region21: #{basic_block.1} parent=0 // pred_fallthru
    _
  // Predicated region
  $region22: #{basic_block.1} parent=0 // pred_check
    _
  $region23: #{basic_block.1} parent=0 // pred_check_branch
    %23 = sbr.rel (0) target = $region25
  $region24: #{basic_block.1} parent=0 // pred_region
    _
  $region25: #{basic_block.1} parent=0 // pred_fallthru
    _
  // Predicated region
  $region26: #{basic_block.1} parent=0 // pred_check
    _
  $region27: #{basic_block.1} parent=0 // pred_check_branch
    %25 = sbr.rel (0) target = $region29
  $region28: #{basic_block.1} parent=0 // pred_region
    _
  $region29: #{basic_block.1} parent=0 // pred_fallthru
    _
  %27 = vst [vmem:[#allocation2] sm:$0xf] 0
  %28 = vst [vmem:[#allocation2 + $0x4] sm:$0xf] 0
  %29 = vst [vmem:[#allocation2 + $0x8] sm:$0x1] 0
  %30 = vst [vmem:[#allocation2 + $0xc] sm:$0xf] 0
  %31 = vst [vmem:[#allocation2 + $0x10] sm:$0xf] 0
  %32 = vst [vmem:[#allocation2 + $0x14] sm:$0x1] 0
  %v33 = vld [vmem:[%s0] sm:$0xff]
  %v34 = vld [vmem:[%s0 + $0x8] sm:$0xff]
  %v35 = vld [vmem:[%s0 + $0x10] sm:$0xff]
  %v36 = vld [vmem:[%s0 + $0x18] sm:$0xff]
  %v37 = vpack.c.bf16 %v34, %v33
  %v38 = vpack.c.bf16 %v36, %v35
  %v41 = vunpack.c.l.b16 %v37
  %v42 = vunpack.c.h.b16 %v37
  %v43 = vunpack.c.l.b16 %v38
  %v44 = vunpack.c.h.b16 %v38
  %v45 = vpack.c.b16 %v41, %v41
  %v46 = vpack.c.b16 %v42, %v42
  %v47 = vpack.c.b16 %v43, %v43
  %v48 = vpack.c.b16 %v44, %v44
  %vm49 = vsmask.f32 256
  %vm50 = vsmask.f32 4368
  %vm51 = vmor %vm49, %vm50
  %v53 = vshrl.u32 %v45, 16
  %v55 = vrot.slane %v53, 7
  %v56 = vshll.u32 %v45, 16
  %v58 = vor.u32 %v55, %v56
  %v59 = vrot.slane %v55, 4
  %v61 = vshrl.u32 %v46, 16
  %v63 = vrot.slane %v61, 7
  %v64 = vshll.u32 %v46, 16
  %v66 = vor.u32 %v63, %v64
  %v67 = vsel %vm51, %v59, %v66
  %v68 = vrot.slane %v63, 4
  %v70 = vshrl.u32 %v47, 16
  %v72 = vrot.slane %v70, 7
  %v73 = vshll.u32 %v47, 16
  %v75 = vor.u32 %v72, %v73
  %v76 = vrot.slane %v72, 4
  %v78 = vshrl.u32 %v48, 16
  %v80 = vrot.slane %v78, 7
  %v81 = vshll.u32 %v48, 16
  %v83 = vor.u32 %v80, %v81
  %v84 = vsel %vm51, %v76, %v83
  %v85 = vrot.slane %v80, 4
  %vm92 = vcmask 1043456
  %vm93 = vsmask.f32 7938
  %vm94 = vmand %vm92, %vm93
  %v95 = vld [vmem:[#allocation2] sm:$0xf]
  %v96 = vsel %vm94, %v58, %v95
  %97 = vst [vmem:[#allocation2] sm:$0xf] %v96
  %98 = vst [vmem:[#allocation2 + $0x4] sm:$0xf] %v67
  %vm99 = vcmask 1040384
  %vm100 = vmand %vm99, %vm49
  %v101 = vld [vmem:[#allocation2 + $0x8] sm:$0x1]
  %v102 = vsel %vm100, %v68, %v101
  %103 = vst [vmem:[#allocation2 + $0x8] sm:$0x1] %v102
  %v104 = vld [vmem:[#allocation2 + $0xc] sm:$0xf]
  %v105 = vsel %vm94, %v75, %v104
  %106 = vst [vmem:[#allocation2 + $0xc] sm:$0xf] %v105
  %107 = vst [vmem:[#allocation2 + $0x10] sm:$0xf] %v84
  %v108 = vld [vmem:[#allocation2 + $0x14] sm:$0x1]
  %v109 = vsel %vm100, %v85, %v108
  %110 = vst [vmem:[#allocation2 + $0x14] sm:$0x1] %v109
  %v111 = vld [vmem:[#allocation2] sm:$0xf]
  %v112 = vld [vmem:[#allocation2 + $0x4] sm:$0xf]
  %v113 = vld [vmem:[#allocation2 + $0xc] sm:$0xf]
  %v114 = vld [vmem:[#allocation2 + $0x10] sm:$0xf]
  %v115 = vld [vmem:[%s1] sm:$0xf]
  %v116 = vld [vmem:[%s1 + $0x4] sm:$0xf]
  %v117 = vld [vmem:[%s1 + $0x8] sm:$0xf]
  %v118 = vld [vmem:[%s1 + $0xc] sm:$0xf]
  %v119 = vld [vmem:[%s1 + $0x10] sm:$0xf]
  %v120 = vld [vmem:[%s1 + $0x14] sm:$0xf]
  %v121 = vld [vmem:[%s1 + $0x18] sm:$0xf]
  %v122 = vld [vmem:[%s1 + $0x1c] sm:$0xf]
  %v123 = vld [vmem:[%s1 + $0x20] sm:$0xf]
  %v124 = vld [vmem:[%s1 + $0x24] sm:$0xf]
  %v125 = vld [vmem:[%s1 + $0x28] sm:$0xf]
  %v126 = vld [vmem:[%s1 + $0x2c] sm:$0xf]
  %v127 = vld [vmem:[%s1 + $0x30] sm:$0xf]
  %v128 = vld [vmem:[%s1 + $0x34] sm:$0xf]
  %v129 = vld [vmem:[%s1 + $0x38] sm:$0xf]
  %v130 = vld [vmem:[%s1 + $0x3c] sm:$0xf]
  %v131 = vld [vmem:[#allocation2 + $0x8] sm:$0x1]
  %v132 = vld [vmem:[#allocation2 + $0x14] sm:$0x1]
  %vm133 = vsmask.f32 3328
  %vm134 = vsmask.f32 7440
  %vm135 = vmor %vm133, %vm134
  %v137 = vshrl.u32 %v111, 16
  %v139 = vrot.slane %v137, 4
  %v140 = vshll.u32 %v111, 16
  %v142 = vrot.slane %v140, 5
  %v143 = vor.u32 %v139, %v142
  %v144 = vrot.slane %v143, 4
  %v146 = vshll.u32 %v112, 16
  %v148 = vrot.slane %v146, 5
  %v149 = vsel %vm135, %v144, %v148
  %v150 = vshrl.u32 %v112, 16
  %v152 = vrot.slane %v150, 4
  %v153 = vor.u32 %v152, %v148
  %v154 = vrot.slane %v153, 4
  %v156 = vshll.u32 %v131, 16
  %v158 = vrot.slane %v156, 5
  %v159 = vsel %vm135, %v154, %v158
  %v161 = vshrl.u32 %v113, 16
  %v163 = vrot.slane %v161, 4
  %v164 = vshll.u32 %v113, 16
  %v166 = vrot.slane %v164, 5
  %v167 = vor.u32 %v163, %v166
  %v168 = vrot.slane %v167, 4
  %v170 = vshll.u32 %v114, 16
  %v172 = vrot.slane %v170, 5
  %v173 = vsel %vm135, %v168, %v172
  %v174 = vshrl.u32 %v114, 16
  %v176 = vrot.slane %v174, 4
  %v177 = vor.u32 %v176, %v172
  %v178 = vrot.slane %v177, 4
  %v180 = vshll.u32 %v132, 16
  %v182 = vrot.slane %v180, 5
  %v183 = vsel %vm135, %v178, %v182
  %s184 = scalar_lea.vmem %s1, 64
  %v185 = vld [vmem:[%s184] sm:$0xf]
  %v186 = vld [vmem:[%s184 + $0x4] sm:$0xf]
  %v187 = vld [vmem:[%s184 + $0x8] sm:$0xf]
  %v188 = vld [vmem:[%s184 + $0xc] sm:$0xf]
  %v189 = vld [vmem:[%s184 + $0x10] sm:$0xf]
  %v190 = vld [vmem:[%s184 + $0x14] sm:$0xf]
  %v191 = vld [vmem:[%s184 + $0x18] sm:$0xf]
  %v192 = vld [vmem:[%s184 + $0x1c] sm:$0xf]
  %v193 = vld [vmem:[%s184 + $0x20] sm:$0xf]
  %v194 = vld [vmem:[%s184 + $0x24] sm:$0xf]
  %v195 = vld [vmem:[%s184 + $0x28] sm:$0xf]
  %v196 = vld [vmem:[%s184 + $0x2c] sm:$0xf]
  %v197 = vld [vmem:[%s184 + $0x30] sm:$0xf]
  %v198 = vld [vmem:[%s184 + $0x34] sm:$0xf]
  %v199 = vld [vmem:[%s184 + $0x38] sm:$0xf]
  %v200 = vld [vmem:[%s184 + $0x3c] sm:$0xf]
  %v201 = vunpack.c.l.b16 %v149
  %v202 = vunpack.c.l.b16 %v159
  %v203 = vunpack.c.l.b16 %v173
  %v204 = vunpack.c.l.b16 %v183
  %v205 = vpack.c.b16 %v202, %v201
  %v206 = vpack.c.b16 %v204, %v203
  %v225 = vunpack.c.l.b16 %v185
  %v226 = vunpack.c.l.b16 %v186
  %v227 = vunpack.c.l.b16 %v187
  %v228 = vunpack.c.l.b16 %v188
  %v229 = vunpack.c.l.b16 %v189
  %v230 = vunpack.c.l.b16 %v190
  %v231 = vunpack.c.l.b16 %v191
  %v232 = vunpack.c.l.b16 %v192
  %v233 = vunpack.c.l.b16 %v193
  %v234 = vunpack.c.l.b16 %v194
  %v235 = vunpack.c.l.b16 %v195
  %v236 = vunpack.c.l.b16 %v196
  %v237 = vunpack.c.l.b16 %v197
  %v238 = vunpack.c.l.b16 %v198
  %v239 = vunpack.c.l.b16 %v199
  %v240 = vunpack.c.l.b16 %v200
  %v241 = vpack.c.b16 %v226, %v225
  %v242 = vpack.c.b16 %v228, %v227
  %v243 = vpack.c.b16 %v230, %v229
  %v244 = vpack.c.b16 %v232, %v231
  %v245 = vpack.c.b16 %v234, %v233
  %v246 = vpack.c.b16 %v236, %v235
  %v247 = vpack.c.b16 %v238, %v237
  %v248 = vpack.c.b16 %v240, %v239
  %257 = vmatprep.subr.bf16.mxu0 0
  %258 = vmatpush1.bf16.msra.mxu0 %v248
  %259 = vmatprep.subr.bf16.mxu0 0
  %260 = vmatpush1.bf16.msra.mxu0 %v247
  %261 = vmatprep.subr.bf16.mxu0 0
  %262 = vmatpush1.bf16.msra.mxu0 %v246
  %263 = vmatprep.subr.bf16.mxu0 0
  %264 = vmatpush1.bf16.msra.mxu0 %v245
  %265 = vmatprep.subr.bf16.mxu0 0
  %266 = vmatpush1.bf16.msra.mxu0 %v244
  %267 = vmatprep.subr.bf16.mxu0 0
  %268 = vmatpush1.bf16.msra.mxu0 %v243
  %269 = vmatprep.subr.bf16.mxu0 0
  %270 = vmatpush1.bf16.msra.mxu0 %v242
  %271 = vmatprep.subr.bf16.mxu0 0
  %272 = vmatpush1.bf16.msra.mxu0 %v241
  %273 = vmatprep.subr.bf16.mxu0 0
  %274 = vmatpush2.bf16.msra.mxu0 0
  %275 = vmatprep.subr.bf16.mxu0 0
  %276 = vmatpush2.bf16.msra.mxu0 0
  %277 = vmatprep.subr.bf16.mxu0 0
  %278 = vmatpush2.bf16.msra.mxu0 0
  %279 = vmatprep.subr.bf16.mxu0 0
  %280 = vmatpush2.bf16.msra.mxu0 0
  %281 = vmatprep.subr.bf16.mxu0 0
  %282 = vmatpush2.bf16.msra.mxu0 0
  %283 = vmatprep.subr.bf16.mxu0 0
  %284 = vmatpush2.bf16.msra.mxu0 0
  %285 = vmatprep.subr.bf16.mxu0 0
  %286 = vmatpush2.bf16.msra.mxu0 0
  %287 = vmatprep.subr.bf16.mxu0 0
  %288 = vmatpush2.bf16.msra.mxu0 0
  %289 = vmatprep.mubr.bf16.mxu0 0
  %290 = vmatmul.mubr.bf16.gmra.mxu0 %v205
  %v291 = vpop.f32.mrf.mxu0
  %v292 = vadd.f32 0.0, %v291
  %v293 = vpop.f32.mrf.mxu0
  %v294 = vpop.f32.mrf.mxu0
  %v295 = vadd.f32 0.0, %v294
  %v296 = vpop.f32.mrf.mxu0
  %297 = vmatprep.mubr.bf16.mxu0 0
  %298 = vmatmul.mubr.bf16.gmra.mxu0 %v206
  %v299 = vpop.f32.mrf.mxu0
  %v300 = vadd.f32 0.0, %v299
  %v301 = vpop.f32.mrf.mxu0
  %v302 = vpop.f32.mrf.mxu0
  %v303 = vadd.f32 0.0, %v302
  %v304 = vpop.f32.mrf.mxu0
  %305 = vdwg.mxu0
  %v310 = vunpack.c.l.b16 %v111
  %v311 = vunpack.c.l.b16 %v112
  %v312 = vunpack.c.l.b16 %v113
  %v313 = vunpack.c.l.b16 %v114
  %v314 = vpack.c.b16 %v311, %v310
  %v315 = vpack.c.b16 %v313, %v312
  %v334 = vunpack.c.l.b16 %v115
  %v335 = vunpack.c.l.b16 %v116
  %v336 = vunpack.c.l.b16 %v117
  %v337 = vunpack.c.l.b16 %v118
  %v338 = vunpack.c.l.b16 %v119
  %v339 = vunpack.c.l.b16 %v120
  %v340 = vunpack.c.l.b16 %v121
  %v341 = vunpack.c.l.b16 %v122
  %v342 = vunpack.c.l.b16 %v123
  %v343 = vunpack.c.l.b16 %v124
  %v344 = vunpack.c.l.b16 %v125
  %v345 = vunpack.c.l.b16 %v126
  %v346 = vunpack.c.l.b16 %v127
  %v347 = vunpack.c.l.b16 %v128
  %v348 = vunpack.c.l.b16 %v129
  %v349 = vunpack.c.l.b16 %v130
  %v350 = vpack.c.b16 %v335, %v334
  %v351 = vpack.c.b16 %v337, %v336
  %v352 = vpack.c.b16 %v339, %v338
  %v353 = vpack.c.b16 %v341, %v340
  %v354 = vpack.c.b16 %v343, %v342
  %v355 = vpack.c.b16 %v345, %v344
  %v356 = vpack.c.b16 %v347, %v346
  %v357 = vpack.c.b16 %v349, %v348
  %366 = vmatprep.subr.bf16.mxu0 0
  %367 = vmatpush1.bf16.msra.mxu0 %v357
  %368 = vmatprep.subr.bf16.mxu0 0
  %369 = vmatpush1.bf16.msra.mxu0 %v356
  %370 = vmatprep.subr.bf16.mxu0 0
  %371 = vmatpush1.bf16.msra.mxu0 %v355
  %372 = vmatprep.subr.bf16.mxu0 0
  %373 = vmatpush1.bf16.msra.mxu0 %v354
  %374 = vmatprep.subr.bf16.mxu0 0
  %375 = vmatpush1.bf16.msra.mxu0 %v353
  %376 = vmatprep.subr.bf16.mxu0 0
  %377 = vmatpush1.bf16.msra.mxu0 %v352
  %378 = vmatprep.subr.bf16.mxu0 0
  %379 = vmatpush1.bf16.msra.mxu0 %v351
  %380 = vmatprep.subr.bf16.mxu0 0
  %381 = vmatpush1.bf16.msra.mxu0 %v350
  %382 = vmatprep.subr.bf16.mxu0 0
  %383 = vmatpush2.bf16.msra.mxu0 0
  %384 = vmatprep.subr.bf16.mxu0 0
  %385 = vmatpush2.bf16.msra.mxu0 0
  %386 = vmatprep.subr.bf16.mxu0 0
  %387 = vmatpush2.bf16.msra.mxu0 0
  %388 = vmatprep.subr.bf16.mxu0 0
  %389 = vmatpush2.bf16.msra.mxu0 0
  %390 = vmatprep.subr.bf16.mxu0 0
  %391 = vmatpush2.bf16.msra.mxu0 0
  %392 = vmatprep.subr.bf16.mxu0 0
  %393 = vmatpush2.bf16.msra.mxu0 0
  %394 = vmatprep.subr.bf16.mxu0 0
  %395 = vmatpush2.bf16.msra.mxu0 0
  %396 = vmatprep.subr.bf16.mxu0 0
  %397 = vmatpush2.bf16.msra.mxu0 0
  %398 = vmatprep.mubr.bf16.mxu0 0
  %399 = vmatmul.mubr.bf16.gmra.mxu0 %v314
  %v400 = vpop.f32.mrf.mxu0
  %v401 = vadd.f32 %v292, %v400
  %v402 = vpop.f32.mrf.mxu0
  %v403 = vpop.f32.mrf.mxu0
  %v404 = vadd.f32 %v295, %v403
  %v405 = vpop.f32.mrf.mxu0
  %406 = vmatprep.mubr.bf16.mxu0 0
  %407 = vmatmul.mubr.bf16.gmra.mxu0 %v315
  %v408 = vpop.f32.mrf.mxu0
  %v409 = vadd.f32 %v300, %v408
  %v410 = vpop.f32.mrf.mxu0
  %v411 = vpop.f32.mrf.mxu0
  %v412 = vadd.f32 %v303, %v411
  %v413 = vpop.f32.mrf.mxu0
  %414 = vdwg.mxu0
  %v415 = vld [vmem:[#allocation2] sm:$0xe]
  %v416 = vld [vmem:[#allocation2 + $0xc] sm:$0xe]
  %vm421 = vcmask 1042432
  %vm422 = vcmask 1046532
  %vm423 = vmor %vm421, %vm422
  %v424 = vrot.slane %v415, 5
  %v425 = vrot.slane %v424, 4
  %v426 = vrot.slane %v112, 5
  %v427 = vsel %vm423, %v425, %v426
  %v428 = vrot.slane %v426, 4
  %v429 = vrot.slane %v131, 5
  %v430 = vsel %vm423, %v428, %v429
  %v431 = vrot.slane %v416, 5
  %v432 = vrot.slane %v431, 4
  %v433 = vrot.slane %v114, 5
  %v434 = vsel %vm423, %v432, %v433
  %v435 = vrot.slane %v433, 4
  %v436 = vrot.slane %v132, 5
  %v437 = vsel %vm423, %v435, %v436
  %s438 = scalar_lea.vmem %s1, 128
  %v439 = vld [vmem:[%s438] sm:$0xf]
  %v440 = vld [vmem:[%s438 + $0x4] sm:$0xf]
  %v441 = vld [vmem:[%s438 + $0x8] sm:$0xf]
  %v442 = vld [vmem:[%s438 + $0xc] sm:$0xf]
  %v443 = vld [vmem:[%s438 + $0x10] sm:$0xf]
  %v444 = vld [vmem:[%s438 + $0x14] sm:$0xf]
  %v445 = vld [vmem:[%s438 + $0x18] sm:$0xf]
  %v446 = vld [vmem:[%s438 + $0x1c] sm:$0xf]
  %v447 = vld [vmem:[%s438 + $0x20] sm:$0xf]
  %v448 = vld [vmem:[%s438 + $0x24] sm:$0xf]
  %v449 = vld [vmem:[%s438 + $0x28] sm:$0xf]
  %v450 = vld [vmem:[%s438 + $0x2c] sm:$0xf]
  %v451 = vld [vmem:[%s438 + $0x30] sm:$0xf]
  %v452 = vld [vmem:[%s438 + $0x34] sm:$0xf]
  %v453 = vld [vmem:[%s438 + $0x38] sm:$0xf]
  %v454 = vld [vmem:[%s438 + $0x3c] sm:$0xf]
  %v455 = vunpack.c.l.b16 %v427
  %v456 = vunpack.c.l.b16 %v430
  %v457 = vunpack.c.l.b16 %v434
  %v458 = vunpack.c.l.b16 %v437
  %v459 = vpack.c.b16 %v456, %v455
  %v460 = vpack.c.b16 %v458, %v457
  %v479 = vunpack.c.l.b16 %v439
  %v480 = vunpack.c.l.b16 %v440
  %v481 = vunpack.c.l.b16 %v441
  %v482 = vunpack.c.l.b16 %v442
  %v483 = vunpack.c.l.b16 %v443
  %v484 = vunpack.c.l.b16 %v444
  %v485 = vunpack.c.l.b16 %v445
  %v486 = vunpack.c.l.b16 %v446
  %v487 = vunpack.c.l.b16 %v447
  %v488 = vunpack.c.l.b16 %v448
  %v489 = vunpack.c.l.b16 %v449
  %v490 = vunpack.c.l.b16 %v450
  %v491 = vunpack.c.l.b16 %v451
  %v492 = vunpack.c.l.b16 %v452
  %v493 = vunpack.c.l.b16 %v453
  %v494 = vunpack.c.l.b16 %v454
  %v495 = vpack.c.b16 %v480, %v479
  %v496 = vpack.c.b16 %v482, %v481
  %v497 = vpack.c.b16 %v484, %v483
  %v498 = vpack.c.b16 %v486, %v485
  %v499 = vpack.c.b16 %v488, %v487
  %v500 = vpack.c.b16 %v490, %v489
  %v501 = vpack.c.b16 %v492, %v491
  %v502 = vpack.c.b16 %v494, %v493
  %511 = vmatprep.subr.bf16.mxu0 0
  %512 = vmatpush1.bf16.msra.mxu0 %v502
  %513 = vmatprep.subr.bf16.mxu0 0
  %514 = vmatpush1.bf16.msra.mxu0 %v501
  %515 = vmatprep.subr.bf16.mxu0 0
  %516 = vmatpush1.bf16.msra.mxu0 %v500
  %517 = vmatprep.subr.bf16.mxu0 0
  %518 = vmatpush1.bf16.msra.mxu0 %v499
  %519 = vmatprep.subr.bf16.mxu0 0
  %520 = vmatpush1.bf16.msra.mxu0 %v498
  %521 = vmatprep.subr.bf16.mxu0 0
  %522 = vmatpush1.bf16.msra.mxu0 %v497
  %523 = vmatprep.subr.bf16.mxu0 0
  %524 = vmatpush1.bf16.msra.mxu0 %v496
  %525 = vmatprep.subr.bf16.mxu0 0
  %526 = vmatpush1.bf16.msra.mxu0 %v495
  %527 = vmatprep.subr.bf16.mxu0 0
  %528 = vmatpush2.bf16.msra.mxu0 0
  %529 = vmatprep.subr.bf16.mxu0 0
  %530 = vmatpush2.bf16.msra.mxu0 0
  %531 = vmatprep.subr.bf16.mxu0 0
  %532 = vmatpush2.bf16.msra.mxu0 0
  %533 = vmatprep.subr.bf16.mxu0 0
  %534 = vmatpush2.bf16.msra.mxu0 0
  %535 = vmatprep.subr.bf16.mxu0 0
  %536 = vmatpush2.bf16.msra.mxu0 0
  %537 = vmatprep.subr.bf16.mxu0 0
  %538 = vmatpush2.bf16.msra.mxu0 0
  %539 = vmatprep.subr.bf16.mxu0 0
  %540 = vmatpush2.bf16.msra.mxu0 0
  %541 = vmatprep.subr.bf16.mxu0 0
  %542 = vmatpush2.bf16.msra.mxu0 0
  %543 = vmatprep.mubr.bf16.mxu0 0
  %544 = vmatmul.mubr.bf16.gmra.mxu0 %v459
  %v545 = vpop.f32.mrf.mxu0
  %v546 = vadd.f32 0.0, %v545
  %v547 = vpop.f32.mrf.mxu0
  %v548 = vpop.f32.mrf.mxu0
  %v549 = vadd.f32 0.0, %v548
  %v550 = vpop.f32.mrf.mxu0
  %551 = vmatprep.mubr.bf16.mxu0 0
  %552 = vmatmul.mubr.bf16.gmra.mxu0 %v460
  %v553 = vpop.f32.mrf.mxu0
  %v554 = vadd.f32 0.0, %v553
  %v555 = vpop.f32.mrf.mxu0
  %v556 = vpop.f32.mrf.mxu0
  %v557 = vadd.f32 0.0, %v556
  %v558 = vpop.f32.mrf.mxu0
  %559 = vdwg.mxu0
  %v560 = vadd.f32 %v401, %v546
  %v561 = vadd.f32 %v404, %v549
  %v562 = vadd.f32 %v409, %v554
  %v563 = vadd.f32 %v412, %v557
  %v564 = vadd.f32 %v560, %v561
  %v565 = vadd.f32 %v564, %v562
  %v566 = vadd.f32 %v565, %v563
  %v567 = vrot.slane %v566, 4
  %v568 = vadd.f32 %v566, %v567
  %v569 = vrot.slane %v568, 2
  %v570 = vadd.f32 %v568, %v569
  %v571 = vrot.slane %v570, 1
  %v572 = vadd.f32 %v570, %v571
  %v573 = vmul.f32 %v560, %v560
  %v574 = vmul.f32 %v561, %v561
  %v575 = vmul.f32 %v562, %v562
  %v576 = vmul.f32 %v563, %v563
  %v577 = vadd.f32 %v573, %v574
  %v578 = vadd.f32 %v577, %v575
  %v579 = vadd.f32 %v578, %v576
  %v580 = vrot.slane %v579, 4
  %v581 = vadd.f32 %v579, %v580
  %v582 = vrot.slane %v581, 2
  %v583 = vadd.f32 %v581, %v582
  %v584 = vrot.slane %v583, 1
  %v585 = vadd.f32 %v583, %v584
  %v586 = vadd.f32 %v572, 0.0
  %v587 = vadd.f32 %v585, 0.0
  %589 = vrot.lane.b32.xlu0 %v572, 120
  %v590 = vpop.permute.xlu0 %589
  %v592 = vadd.f32 %v586, %v590
  %594 = vrot.lane.b32.xlu0 %v585, 120
  %v595 = vpop.permute.xlu0 %594
  %v597 = vadd.f32 %v587, %v595
  %598 = vrot.lane.b32.xlu0 %v572, 112
  %v599 = vpop.permute.xlu0 %598
  %v601 = vadd.f32 %v592, %v599
  %602 = vrot.lane.b32.xlu0 %v585, 112
  %v603 = vpop.permute.xlu0 %602
  %v605 = vadd.f32 %v597, %v603
  %606 = vrot.lane.b32.xlu0 %v572, 104
  %v607 = vpop.permute.xlu0 %606
  %v609 = vadd.f32 %v601, %v607
  %610 = vrot.lane.b32.xlu0 %v585, 104
  %v611 = vpop.permute.xlu0 %610
  %v613 = vadd.f32 %v605, %v611
  %614 = vrot.lane.b32.xlu0 %v572, 96
  %v615 = vpop.permute.xlu0 %614
  %v617 = vadd.f32 %v609, %v615
  %618 = vrot.lane.b32.xlu0 %v585, 96
  %v619 = vpop.permute.xlu0 %618
  %v621 = vadd.f32 %v613, %v619
  %622 = vrot.lane.b32.xlu0 %v572, 88
  %v623 = vpop.permute.xlu0 %622
  %v625 = vadd.f32 %v617, %v623
  %626 = vrot.lane.b32.xlu0 %v585, 88
  %v627 = vpop.permute.xlu0 %626
  %v629 = vadd.f32 %v621, %v627
  %630 = vrot.lane.b32.xlu0 %v572, 80
  %v631 = vpop.permute.xlu0 %630
  %v633 = vadd.f32 %v625, %v631
  %634 = vrot.lane.b32.xlu0 %v585, 80
  %v635 = vpop.permute.xlu0 %634
  %v637 = vadd.f32 %v629, %v635
  %638 = vrot.lane.b32.xlu0 %v572, 72
  %v639 = vpop.permute.xlu0 %638
  %v641 = vadd.f32 %v633, %v639
  %642 = vrot.lane.b32.xlu0 %v585, 72
  %v643 = vpop.permute.xlu0 %642
  %v645 = vadd.f32 %v637, %v643
  %646 = vrot.lane.b32.xlu0 %v572, 64
  %v647 = vpop.permute.xlu0 %646
  %v649 = vadd.f32 %v641, %v647
  %650 = vrot.lane.b32.xlu0 %v585, 64
  %v651 = vpop.permute.xlu0 %650
  %v653 = vadd.f32 %v645, %v651
  %654 = vrot.lane.b32.xlu0 %v572, 56
  %v655 = vpop.permute.xlu0 %654
  %v657 = vadd.f32 %v649, %v655
  %658 = vrot.lane.b32.xlu0 %v585, 56
  %v659 = vpop.permute.xlu0 %658
  %v661 = vadd.f32 %v653, %v659
  %662 = vrot.lane.b32.xlu0 %v572, 48
  %v663 = vpop.permute.xlu0 %662
  %v665 = vadd.f32 %v657, %v663
  %666 = vrot.lane.b32.xlu0 %v585, 48
  %v667 = vpop.permute.xlu0 %666
  %v669 = vadd.f32 %v661, %v667
  %670 = vrot.lane.b32.xlu0 %v572, 40
  %v671 = vpop.permute.xlu0 %670
  %v673 = vadd.f32 %v665, %v671
  %674 = vrot.lane.b32.xlu0 %v585, 40
  %v675 = vpop.permute.xlu0 %674
  %v677 = vadd.f32 %v669, %v675
  %678 = vrot.lane.b32.xlu0 %v572, 32
  %v679 = vpop.permute.xlu0 %678
  %v681 = vadd.f32 %v673, %v679
  %682 = vrot.lane.b32.xlu0 %v585, 32
  %v683 = vpop.permute.xlu0 %682
  %v685 = vadd.f32 %v677, %v683
  %686 = vrot.lane.b32.xlu0 %v572, 24
  %v687 = vpop.permute.xlu0 %686
  %v689 = vadd.f32 %v681, %v687
  %690 = vrot.lane.b32.xlu0 %v585, 24
  %v691 = vpop.permute.xlu0 %690
  %v693 = vadd.f32 %v685, %v691
  %694 = vrot.lane.b32.xlu0 %v572, 16
  %v695 = vpop.permute.xlu0 %694
  %v697 = vadd.f32 %v689, %v695
  %698 = vrot.lane.b32.xlu0 %v585, 16
  %v699 = vpop.permute.xlu0 %698
  %v701 = vadd.f32 %v693, %v699
  %702 = vrot.lane.b32.xlu0 %v572, 8
  %v703 = vpop.permute.xlu0 %702
  %v705 = vadd.f32 %v697, %v703
  %706 = vrot.lane.b32.xlu0 %v585, 8
  %v707 = vpop.permute.xlu0 %706
  %v709 = vadd.f32 %v701, %v707
  %v710 = vrcp.pop 512.0
  %v711 = vmul.f32 %v705, %v710
  %v712 = vmul.f32 %v709, %v710
  %v713 = vmul.f32 %v711, %v711
  %v714 = vsub.f32 %v712, %v713
  %v715 = vld [vmem:[%s2] sm:$0x1]
  %v716 = vadd.f32 %v714, 1e-05
  %v717 = vrsqrt.pop %v716
  %v718 = vmul.f32 %v715, %v717
  %v719 = vld [vmem:[%s3] sm:$0x1]
  %v720 = vmul.f32 %v711, %v718
  %v721 = vsub.f32 %v719, %v720
  %v723 = vlaneseq
  %v724 = vshrl.u32 %v723, 7
  %v725 = vsub.s32 0, %v724
  %v726 = vrot.slane %v718, %v725
  %727 = vrot.lane.b32.xlu0 %v726, 8
  %v728 = vpop.permute.xlu0 %727
  %730 = vrot.lane.b32.xlu0 %v726, 16
  %v731 = vpop.permute.xlu0 %730
  %733 = vrot.lane.b32.xlu0 %v726, 24
  %v734 = vpop.permute.xlu0 %733
  %736 = vrot.lane.b32.xlu0 %v726, 32
  %v737 = vpop.permute.xlu0 %736
  %739 = vrot.lane.b32.xlu0 %v726, 40
  %v740 = vpop.permute.xlu0 %739
  %742 = vrot.lane.b32.xlu0 %v726, 48
  %v743 = vpop.permute.xlu0 %742
  %745 = vrot.lane.b32.xlu0 %v726, 56
  %v746 = vpop.permute.xlu0 %745
  %748 = vrot.lane.b32.xlu0 %v726, 64
  %v749 = vpop.permute.xlu0 %748
  %751 = vrot.lane.b32.xlu0 %v726, 72
  %v752 = vpop.permute.xlu0 %751
  %754 = vrot.lane.b32.xlu0 %v726, 80
  %v755 = vpop.permute.xlu0 %754
  %757 = vrot.lane.b32.xlu0 %v726, 88
  %v758 = vpop.permute.xlu0 %757
  %760 = vrot.lane.b32.xlu0 %v726, 96
  %v761 = vpop.permute.xlu0 %760
  %763 = vrot.lane.b32.xlu0 %v726, 104
  %v764 = vpop.permute.xlu0 %763
  %766 = vrot.lane.b32.xlu0 %v726, 112
  %v767 = vpop.permute.xlu0 %766
  %769 = vrot.lane.b32.xlu0 %v726, 120
  %v770 = vpop.permute.xlu0 %769
  %vm772 = vcmask 64512
  %v773 = vsel %vm772, %v718, %v728
  %vm774 = vcmask 130048
  %v775 = vsel %vm774, %v773, %v731
  %vm776 = vcmask 195584
  %v777 = vsel %vm776, %v775, %v734
  %vm778 = vcmask 261120
  %v779 = vsel %vm778, %v777, %v737
  %vm780 = vcmask 326656
  %v781 = vsel %vm780, %v779, %v740
  %vm782 = vcmask 392192
  %v783 = vsel %vm782, %v781, %v743
  %vm784 = vcmask 457728
  %v785 = vsel %vm784, %v783, %v746
  %vm786 = vcmask 523264
  %v787 = vsel %vm786, %v785, %v749
  %vm788 = vcmask 588800
  %v789 = vsel %vm788, %v787, %v752
  %vm790 = vcmask 654336
  %v791 = vsel %vm790, %v789, %v755
  %vm792 = vcmask 719872
  %v793 = vsel %vm792, %v791, %v758
  %vm794 = vcmask 785408
  %v795 = vsel %vm794, %v793, %v761
  %vm796 = vcmask 850944
  %v797 = vsel %vm796, %v795, %v764
  %vm798 = vcmask 916480
  %v799 = vsel %vm798, %v797, %v767
  %vm800 = vcmask 982016
  %v801 = vsel %vm800, %v799, %v770
  %v803 = vlaneseq
  %v804 = vshrl.u32 %v803, 7
  %v805 = vsub.s32 0, %v804
  %v806 = vrot.slane %v721, %v805
  %807 = vrot.lane.b32.xlu0 %v806, 8
  %v808 = vpop.permute.xlu0 %807
  %810 = vrot.lane.b32.xlu0 %v806, 16
  %v811 = vpop.permute.xlu0 %810
  %813 = vrot.lane.b32.xlu0 %v806, 24
  %v814 = vpop.permute.xlu0 %813
  %816 = vrot.lane.b32.xlu0 %v806, 32
  %v817 = vpop.permute.xlu0 %816
  %819 = vrot.lane.b32.xlu0 %v806, 40
  %v820 = vpop.permute.xlu0 %819
  %822 = vrot.lane.b32.xlu0 %v806, 48
  %v823 = vpop.permute.xlu0 %822
  %825 = vrot.lane.b32.xlu0 %v806, 56
  %v826 = vpop.permute.xlu0 %825
  %828 = vrot.lane.b32.xlu0 %v806, 64
  %v829 = vpop.permute.xlu0 %828
  %831 = vrot.lane.b32.xlu0 %v806, 72
  %v832 = vpop.permute.xlu0 %831
  %834 = vrot.lane.b32.xlu0 %v806, 80
  %v835 = vpop.permute.xlu0 %834
  %837 = vrot.lane.b32.xlu0 %v806, 88
  %v838 = vpop.permute.xlu0 %837
  %840 = vrot.lane.b32.xlu0 %v806, 96
  %v841 = vpop.permute.xlu0 %840
  %843 = vrot.lane.b32.xlu0 %v806, 104
  %v844 = vpop.permute.xlu0 %843
  %846 = vrot.lane.b32.xlu0 %v806, 112
  %v847 = vpop.permute.xlu0 %846
  %849 = vrot.lane.b32.xlu0 %v806, 120
  %v850 = vpop.permute.xlu0 %849
  %v852 = vsel %vm772, %v721, %v808
  %v853 = vsel %vm774, %v852, %v811
  %v854 = vsel %vm776, %v853, %v814
  %v855 = vsel %vm778, %v854, %v817
  %v856 = vsel %vm780, %v855, %v820
  %v857 = vsel %vm782, %v856, %v823
  %v858 = vsel %vm784, %v857, %v826
  %v859 = vsel %vm786, %v858, %v829
  %v860 = vsel %vm788, %v859, %v832
  %v861 = vsel %vm790, %v860, %v835
  %v862 = vsel %vm792, %v861, %v838
  %v863 = vsel %vm794, %v862, %v841
  %v864 = vsel %vm796, %v863, %v844
  %v865 = vsel %vm798, %v864, %v847
  %v866 = vsel %vm800, %v865, %v850
  %v867 = vlaneseq
  %v868 = vshrl.u32 %v867, 7
  %v869 = vsub.s32 0, %v868
  %v870 = vrot.slane %v801, %v869
  %v871 = vmul.f32 %v560, %v870
  %v872 = vmul.f32 %v561, %v870
  %v873 = vmul.f32 %v562, %v870
  %v874 = vmul.f32 %v563, %v870
  %v875 = vlaneseq
  %v876 = vshrl.u32 %v875, 7
  %v877 = vsub.s32 0, %v876
  %v878 = vrot.slane %v866, %v877
  %v879 = vadd.f32 %v871, %v878
  %v880 = vadd.f32 %v872, %v878
  %v881 = vadd.f32 %v873, %v878
  %v882 = vadd.f32 %v874, %v878
  %v883 = vmax.f32 %v879, 0.0
  %v884 = vmax.f32 %v880, 0.0
  %v885 = vmax.f32 %v881, 0.0
  %v886 = vmax.f32 %v882, 0.0
  %v887 = vpack.c.bf16 %v884, %v883
  %v888 = vpack.c.bf16 %v886, %v885
  %v891 = vunpack.c.l.b16 %v887
  %v892 = vunpack.c.h.b16 %v887
  %v893 = vunpack.c.l.b16 %v888
  %v894 = vunpack.c.h.b16 %v888
  %v895 = vpack.c.b16 %v891, %v891
  %v896 = vpack.c.b16 %v892, %v892
  %v897 = vpack.c.b16 %v893, %v893
  %v898 = vpack.c.b16 %v894, %v894
  %v900 = vshrl.u32 %v895, 16
  %v902 = vrot.slane %v900, 7
  %v903 = vshll.u32 %v895, 16
  %v905 = vor.u32 %v902, %v903
  %v906 = vrot.slane %v902, 4
  %v908 = vshrl.u32 %v896, 16
  %v910 = vrot.slane %v908, 7
  %v911 = vshll.u32 %v896, 16
  %v913 = vor.u32 %v910, %v911
  %v914 = vsel %vm51, %v906, %v913
  %v915 = vrot.slane %v910, 4
  %v917 = vshrl.u32 %v897, 16
  %v919 = vrot.slane %v917, 7
  %v920 = vshll.u32 %v897, 16
  %v922 = vor.u32 %v919, %v920
  %v923 = vrot.slane %v919, 4
  %v925 = vshrl.u32 %v898, 16
  %v927 = vrot.slane %v925, 7
  %v928 = vshll.u32 %v898, 16
  %v930 = vor.u32 %v927, %v928
  %v931 = vsel %vm51, %v923, %v930
  %v932 = vrot.slane %v927, 4
  %v939 = vsel %vm94, %v905, %v111
  %940 = vst [vmem:[#allocation2] sm:$0xf] %v939
  %941 = vst [vmem:[#allocation2 + $0x4] sm:$0xf] %v914
  %v942 = vld [vmem:[#allocation2 + $0x8] sm:$0x1]
  %v943 = vsel %vm100, %v915, %v942
  %944 = vst [vmem:[#allocation2 + $0x8] sm:$0x1] %v943
  %v945 = vld [vmem:[#allocation2 + $0xc] sm:$0xf]
  %v946 = vsel %vm94, %v922, %v945
  %947 = vst [vmem:[#allocation2 + $0xc] sm:$0xf] %v946
  %948 = vst [vmem:[#allocation2 + $0x10] sm:$0xf] %v931
  %v949 = vld [vmem:[#allocation2 + $0x14] sm:$0x1]
  %v950 = vsel %vm100, %v932, %v949
  %951 = vst [vmem:[#allocation2 + $0x14] sm:$0x1] %v950
  %v952 = vld [vmem:[#allocation2] sm:$0xf]
  %v953 = vld [vmem:[#allocation2 + $0x4] sm:$0xf]
  %v954 = vld [vmem:[#allocation2 + $0xc] sm:$0xf]
  %v955 = vld [vmem:[#allocation2 + $0x10] sm:$0xf]
  %v956 = vld [vmem:[%s4] sm:$0xf]
  %v957 = vld [vmem:[%s4 + $0x4] sm:$0xf]
  %v958 = vld [vmem:[%s4 + $0x8] sm:$0xf]
  %v959 = vld [vmem:[%s4 + $0xc] sm:$0xf]
  %v960 = vld [vmem:[%s4 + $0x10] sm:$0xf]
  %v961 = vld [vmem:[%s4 + $0x14] sm:$0xf]
  %v962 = vld [vmem:[%s4 + $0x18] sm:$0xf]
  %v963 = vld [vmem:[%s4 + $0x1c] sm:$0xf]
  %v964 = vld [vmem:[%s4 + $0x20] sm:$0xf]
  %v965 = vld [vmem:[%s4 + $0x24] sm:$0xf]
  %v966 = vld [vmem:[%s4 + $0x28] sm:$0xf]
  %v967 = vld [vmem:[%s4 + $0x2c] sm:$0xf]
  %v968 = vld [vmem:[%s4 + $0x30] sm:$0xf]
  %v969 = vld [vmem:[%s4 + $0x34] sm:$0xf]
  %v970 = vld [vmem:[%s4 + $0x38] sm:$0xf]
  %v971 = vld [vmem:[%s4 + $0x3c] sm:$0xf]
  %v972 = vld [vmem:[#allocation2 + $0x8] sm:$0x1]
  %v973 = vld [vmem:[#allocation2 + $0x14] sm:$0x1]
  %v975 = vshrl.u32 %v952, 16
  %v977 = vrot.slane %v975, 4
  %v978 = vshll.u32 %v952, 16
  %v980 = vrot.slane %v978, 5
  %v981 = vor.u32 %v977, %v980
  %v982 = vrot.slane %v981, 4
  %v984 = vshll.u32 %v953, 16
  %v986 = vrot.slane %v984, 5
  %v987 = vsel %vm135, %v982, %v986
  %v988 = vshrl.u32 %v953, 16
  %v990 = vrot.slane %v988, 4
  %v991 = vor.u32 %v990, %v986
  %v992 = vrot.slane %v991, 4
  %v994 = vshll.u32 %v972, 16
  %v996 = vrot.slane %v994, 5
  %v997 = vsel %vm135, %v992, %v996
  %v999 = vshrl.u32 %v954, 16
  %v1001 = vrot.slane %v999, 4
  %v1002 = vshll.u32 %v954, 16
  %v1004 = vrot.slane %v1002, 5
  %v1005 = vor.u32 %v1001, %v1004
  %v1006 = vrot.slane %v1005, 4
  %v1008 = vshll.u32 %v955, 16
  %v1010 = vrot.slane %v1008, 5
  %v1011 = vsel %vm135, %v1006, %v1010
  %v1012 = vshrl.u32 %v955, 16
  %v1014 = vrot.slane %v1012, 4
  %v1015 = vor.u32 %v1014, %v1010
  %v1016 = vrot.slane %v1015, 4
  %v1018 = vshll.u32 %v973, 16
  %v1020 = vrot.slane %v1018, 5
  %v1021 = vsel %vm135, %v1016, %v1020
  %s1022 = scalar_lea.vmem %s4, 64
  %v1023 = vld [vmem:[%s1022] sm:$0xf]
  %v1024 = vld [vmem:[%s1022 + $0x4] sm:$0xf]
  %v1025 = vld [vmem:[%s1022 + $0x8] sm:$0xf]
  %v1026 = vld [vmem:[%s1022 + $0xc] sm:$0xf]
  %v1027 = vld [vmem:[%s1022 + $0x10] sm:$0xf]
  %v1028 = vld [vmem:[%s1022 + $0x14] sm:$0xf]
  %v1029 = vld [vmem:[%s1022 + $0x18] sm:$0xf]
  %v1030 = vld [vmem:[%s1022 + $0x1c] sm:$0xf]
  %v1031 = vld [vmem:[%s1022 + $0x20] sm:$0xf]
  %v1032 = vld [vmem:[%s1022 + $0x24] sm:$0xf]
  %v1033 = vld [vmem:[%s1022 + $0x28] sm:$0xf]
  %v1034 = vld [vmem:[%s1022 + $0x2c] sm:$0xf]
  %v1035 = vld [vmem:[%s1022 + $0x30] sm:$0xf]
  %v1036 = vld [vmem:[%s1022 + $0x34] sm:$0xf]
  %v1037 = vld [vmem:[%s1022 + $0x38] sm:$0xf]
  %v1038 = vld [vmem:[%s1022 + $0x3c] sm:$0xf]
  %v1039 = vunpack.c.l.b16 %v987
  %v1040 = vunpack.c.l.b16 %v997
  %v1041 = vunpack.c.l.b16 %v1011
  %v1042 = vunpack.c.l.b16 %v1021
  %v1043 = vpack.c.b16 %v1040, %v1039
  %v1044 = vpack.c.b16 %v1042, %v1041
  %v1063 = vunpack.c.l.b16 %v1023
  %v1064 = vunpack.c.l.b16 %v1024
  %v1065 = vunpack.c.l.b16 %v1025
  %v1066 = vunpack.c.l.b16 %v1026
  %v1067 = vunpack.c.l.b16 %v1027
  %v1068 = vunpack.c.l.b16 %v1028
  %v1069 = vunpack.c.l.b16 %v1029
  %v1070 = vunpack.c.l.b16 %v1030
  %v1071 = vunpack.c.l.b16 %v1031
  %v1072 = vunpack.c.l.b16 %v1032
  %v1073 = vunpack.c.l.b16 %v1033
  %v1074 = vunpack.c.l.b16 %v1034
  %v1075 = vunpack.c.l.b16 %v1035
  %v1076 = vunpack.c.l.b16 %v1036
  %v1077 = vunpack.c.l.b16 %v1037
  %v1078 = vunpack.c.l.b16 %v1038
  %v1079 = vpack.c.b16 %v1064, %v1063
  %v1080 = vpack.c.b16 %v1066, %v1065
  %v1081 = vpack.c.b16 %v1068, %v1067
  %v1082 = vpack.c.b16 %v1070, %v1069
  %v1083 = vpack.c.b16 %v1072, %v1071
  %v1084 = vpack.c.b16 %v1074, %v1073
  %v1085 = vpack.c.b16 %v1076, %v1075
  %v1086 = vpack.c.b16 %v1078, %v1077
  %1095 = vmatprep.subr.bf16.mxu0 0
  %1096 = vmatpush1.bf16.msra.mxu0 %v1086
  %1097 = vmatprep.subr.bf16.mxu0 0
  %1098 = vmatpush1.bf16.msra.mxu0 %v1085
  %1099 = vmatprep.subr.bf16.mxu0 0
  %1100 = vmatpush1.bf16.msra.mxu0 %v1084
  %1101 = vmatprep.subr.bf16.mxu0 0
  %1102 = vmatpush1.bf16.msra.mxu0 %v1083
  %1103 = vmatprep.subr.bf16.mxu0 0
  %1104 = vmatpush1.bf16.msra.mxu0 %v1082
  %1105 = vmatprep.subr.bf16.mxu0 0
  %1106 = vmatpush1.bf16.msra.mxu0 %v1081
  %1107 = vmatprep.subr.bf16.mxu0 0
  %1108 = vmatpush1.bf16.msra.mxu0 %v1080
  %1109 = vmatprep.subr.bf16.mxu0 0
  %1110 = vmatpush1.bf16.msra.mxu0 %v1079
  %1111 = vmatprep.subr.bf16.mxu0 0
  %1112 = vmatpush2.bf16.msra.mxu0 0
  %1113 = vmatprep.subr.bf16.mxu0 0
  %1114 = vmatpush2.bf16.msra.mxu0 0
  %1115 = vmatprep.subr.bf16.mxu0 0
  %1116 = vmatpush2.bf16.msra.mxu0 0
  %1117 = vmatprep.subr.bf16.mxu0 0
  %1118 = vmatpush2.bf16.msra.mxu0 0
  %1119 = vmatprep.subr.bf16.mxu0 0
  %1120 = vmatpush2.bf16.msra.mxu0 0
  %1121 = vmatprep.subr.bf16.mxu0 0
  %1122 = vmatpush2.bf16.msra.mxu0 0
  %1123 = vmatprep.subr.bf16.mxu0 0
  %1124 = vmatpush2.bf16.msra.mxu0 0
  %1125 = vmatprep.subr.bf16.mxu0 0
  %1126 = vmatpush2.bf16.msra.mxu0 0
  %1127 = vmatprep.mubr.bf16.mxu0 0
  %1128 = vmatmul.mubr.bf16.gmra.mxu0 %v1043
  %v1129 = vpop.f32.mrf.mxu0
  %v1130 = vadd.f32 0.0, %v1129
  %v1131 = vpop.f32.mrf.mxu0
  %v1132 = vpop.f32.mrf.mxu0
  %v1133 = vadd.f32 0.0, %v1132
  %v1134 = vpop.f32.mrf.mxu0
  %1135 = vmatprep.mubr.bf16.mxu0 0
  %1136 = vmatmul.mubr.bf16.gmra.mxu0 %v1044
  %v1137 = vpop.f32.mrf.mxu0
  %v1138 = vadd.f32 0.0, %v1137
  %v1139 = vpop.f32.mrf.mxu0
  %v1140 = vpop.f32.mrf.mxu0
  %v1141 = vadd.f32 0.0, %v1140
  %v1142 = vpop.f32.mrf.mxu0
  %1143 = vdwg.mxu0
  %v1148 = vunpack.c.l.b16 %v952
  %v1149 = vunpack.c.l.b16 %v953
  %v1150 = vunpack.c.l.b16 %v954
  %v1151 = vunpack.c.l.b16 %v955
  %v1152 = vpack.c.b16 %v1149, %v1148
  %v1153 = vpack.c.b16 %v1151, %v1150
  %v1172 = vunpack.c.l.b16 %v956
  %v1173 = vunpack.c.l.b16 %v957
  %v1174 = vunpack.c.l.b16 %v958
  %v1175 = vunpack.c.l.b16 %v959
  %v1176 = vunpack.c.l.b16 %v960
  %v1177 = vunpack.c.l.b16 %v961
  %v1178 = vunpack.c.l.b16 %v962
  %v1179 = vunpack.c.l.b16 %v963
  %v1180 = vunpack.c.l.b16 %v964
  %v1181 = vunpack.c.l.b16 %v965
  %v1182 = vunpack.c.l.b16 %v966
  %v1183 = vunpack.c.l.b16 %v967
  %v1184 = vunpack.c.l.b16 %v968
  %v1185 = vunpack.c.l.b16 %v969
  %v1186 = vunpack.c.l.b16 %v970
  %v1187 = vunpack.c.l.b16 %v971
  %v1188 = vpack.c.b16 %v1173, %v1172
  %v1189 = vpack.c.b16 %v1175, %v1174
  %v1190 = vpack.c.b16 %v1177, %v1176
  %v1191 = vpack.c.b16 %v1179, %v1178
  %v1192 = vpack.c.b16 %v1181, %v1180
  %v1193 = vpack.c.b16 %v1183, %v1182
  %v1194 = vpack.c.b16 %v1185, %v1184
  %v1195 = vpack.c.b16 %v1187, %v1186
  %1204 = vmatprep.subr.bf16.mxu0 0
  %1205 = vmatpush1.bf16.msra.mxu0 %v1195
  %1206 = vmatprep.subr.bf16.mxu0 0
  %1207 = vmatpush1.bf16.msra.mxu0 %v1194
  %1208 = vmatprep.subr.bf16.mxu0 0
  %1209 = vmatpush1.bf16.msra.mxu0 %v1193
  %1210 = vmatprep.subr.bf16.mxu0 0
  %1211 = vmatpush1.bf16.msra.mxu0 %v1192
  %1212 = vmatprep.subr.bf16.mxu0 0
  %1213 = vmatpush1.bf16.msra.mxu0 %v1191
  %1214 = vmatprep.subr.bf16.mxu0 0
  %1215 = vmatpush1.bf16.msra.mxu0 %v1190
  %1216 = vmatprep.subr.bf16.mxu0 0
  %1217 = vmatpush1.bf16.msra.mxu0 %v1189
  %1218 = vmatprep.subr.bf16.mxu0 0
  %1219 = vmatpush1.bf16.msra.mxu0 %v1188
  %1220 = vmatprep.subr.bf16.mxu0 0
  %1221 = vmatpush2.bf16.msra.mxu0 0
  %1222 = vmatprep.subr.bf16.mxu0 0
  %1223 = vmatpush2.bf16.msra.mxu0 0
  %1224 = vmatprep.subr.bf16.mxu0 0
  %1225 = vmatpush2.bf16.msra.mxu0 0
  %1226 = vmatprep.subr.bf16.mxu0 0
  %1227 = vmatpush2.bf16.msra.mxu0 0
  %1228 = vmatprep.subr.bf16.mxu0 0
  %1229 = vmatpush2.bf16.msra.mxu0 0
  %1230 = vmatprep.subr.bf16.mxu0 0
  %1231 = vmatpush2.bf16.msra.mxu0 0
  %1232 = vmatprep.subr.bf16.mxu0 0
  %1233 = vmatpush2.bf16.msra.mxu0 0
  %1234 = vmatprep.subr.bf16.mxu0 0
  %1235 = vmatpush2.bf16.msra.mxu0 0
  %1236 = vmatprep.mubr.bf16.mxu0 0
  %1237 = vmatmul.mubr.bf16.gmra.mxu0 %v1152
  %v1238 = vpop.f32.mrf.mxu0
  %v1239 = vadd.f32 %v1130, %v1238
  %v1240 = vpop.f32.mrf.mxu0
  %v1241 = vpop.f32.mrf.mxu0
  %v1242 = vadd.f32 %v1133, %v1241
  %v1243 = vpop.f32.mrf.mxu0
  %1244 = vmatprep.mubr.bf16.mxu0 0
  %1245 = vmatmul.mubr.bf16.gmra.mxu0 %v1153
  %v1246 = vpop.f32.mrf.mxu0
  %v1247 = vadd.f32 %v1138, %v1246
  %v1248 = vpop.f32.mrf.mxu0
  %v1249 = vpop.f32.mrf.mxu0
  %v1250 = vadd.f32 %v1141, %v1249
  %v1251 = vpop.f32.mrf.mxu0
  %1252 = vdwg.mxu0
  %v1253 = vld [vmem:[#allocation2] sm:$0xe]
  %v1254 = vld [vmem:[#allocation2 + $0xc] sm:$0xe]
  %v1259 = vrot.slane %v1253, 5
  %v1260 = vrot.slane %v1259, 4
  %v1261 = vrot.slane %v953, 5
  %v1262 = vsel %vm423, %v1260, %v1261
  %v1263 = vrot.slane %v1261, 4
  %v1264 = vrot.slane %v972, 5
  %v1265 = vsel %vm423, %v1263, %v1264
  %v1266 = vrot.slane %v1254, 5
  %v1267 = vrot.slane %v1266, 4
  %v1268 = vrot.slane %v955, 5
  %v1269 = vsel %vm423, %v1267, %v1268
  %v1270 = vrot.slane %v1268, 4
  %v1271 = vrot.slane %v973, 5
  %v1272 = vsel %vm423, %v1270, %v1271
  %s1273 = scalar_lea.vmem %s4, 128
  %v1274 = vld [vmem:[%s1273] sm:$0xf]
  %v1275 = vld [vmem:[%s1273 + $0x4] sm:$0xf]
  %v1276 = vld [vmem:[%s1273 + $0x8] sm:$0xf]
  %v1277 = vld [vmem:[%s1273 + $0xc] sm:$0xf]
  %v1278 = vld [vmem:[%s1273 + $0x10] sm:$0xf]
  %v1279 = vld [vmem:[%s1273 + $0x14] sm:$0xf]
  %v1280 = vld [vmem:[%s1273 + $0x18] sm:$0xf]
  %v1281 = vld [vmem:[%s1273 + $0x1c] sm:$0xf]
  %v1282 = vld [vmem:[%s1273 + $0x20] sm:$0xf]
  %v1283 = vld [vmem:[%s1273 + $0x24] sm:$0xf]
  %v1284 = vld [vmem:[%s1273 + $0x28] sm:$0xf]
  %v1285 = vld [vmem:[%s1273 + $0x2c] sm:$0xf]
  %v1286 = vld [vmem:[%s1273 + $0x30] sm:$0xf]
  %v1287 = vld [vmem:[%s1273 + $0x34] sm:$0xf]
  %v1288 = vld [vmem:[%s1273 + $0x38] sm:$0xf]
  %v1289 = vld [vmem:[%s1273 + $0x3c] sm:$0xf]
  %v1290 = vunpack.c.l.b16 %v1262
  %v1291 = vunpack.c.l.b16 %v1265
  %v1292 = vunpack.c.l.b16 %v1269
  %v1293 = vunpack.c.l.b16 %v1272
  %v1294 = vpack.c.b16 %v1291, %v1290
  %v1295 = vpack.c.b16 %v1293, %v1292
  %v1314 = vunpack.c.l.b16 %v1274
  %v1315 = vunpack.c.l.b16 %v1275
  %v1316 = vunpack.c.l.b16 %v1276
  %v1317 = vunpack.c.l.b16 %v1277
  %v1318 = vunpack.c.l.b16 %v1278
  %v1319 = vunpack.c.l.b16 %v1279
  %v1320 = vunpack.c.l.b16 %v1280
  %v1321 = vunpack.c.l.b16 %v1281
  %v1322 = vunpack.c.l.b16 %v1282
  %v1323 = vunpack.c.l.b16 %v1283
  %v1324 = vunpack.c.l.b16 %v1284
  %v1325 = vunpack.c.l.b16 %v1285
  %v1326 = vunpack.c.l.b16 %v1286
  %v1327 = vunpack.c.l.b16 %v1287
  %v1328 = vunpack.c.l.b16 %v1288
  %v1329 = vunpack.c.l.b16 %v1289
  %v1330 = vpack.c.b16 %v1315, %v1314
  %v1331 = vpack.c.b16 %v1317, %v1316
  %v1332 = vpack.c.b16 %v1319, %v1318
  %v1333 = vpack.c.b16 %v1321, %v1320
  %v1334 = vpack.c.b16 %v1323, %v1322
  %v1335 = vpack.c.b16 %v1325, %v1324
  %v1336 = vpack.c.b16 %v1327, %v1326
  %v1337 = vpack.c.b16 %v1329, %v1328
  %1346 = vmatprep.subr.bf16.mxu0 0
  %1347 = vmatpush1.bf16.msra.mxu0 %v1337
  %1348 = vmatprep.subr.bf16.mxu0 0
  %1349 = vmatpush1.bf16.msra.mxu0 %v1336
  %1350 = vmatprep.subr.bf16.mxu0 0
  %1351 = vmatpush1.bf16.msra.mxu0 %v1335
  %1352 = vmatprep.subr.bf16.mxu0 0
  %1353 = vmatpush1.bf16.msra.mxu0 %v1334
  %1354 = vmatprep.subr.bf16.mxu0 0
  %1355 = vmatpush1.bf16.msra.mxu0 %v1333
  %1356 = vmatprep.subr.bf16.mxu0 0
  %1357 = vmatpush1.bf16.msra.mxu0 %v1332
  %1358 = vmatprep.subr.bf16.mxu0 0
  %1359 = vmatpush1.bf16.msra.mxu0 %v1331
  %1360 = vmatprep.subr.bf16.mxu0 0
  %1361 = vmatpush1.bf16.msra.mxu0 %v1330
  %1362 = vmatprep.subr.bf16.mxu0 0
  %1363 = vmatpush2.bf16.msra.mxu0 0
  %1364 = vmatprep.subr.bf16.mxu0 0
  %1365 = vmatpush2.bf16.msra.mxu0 0
  %1366 = vmatprep.subr.bf16.mxu0 0
  %1367 = vmatpush2.bf16.msra.mxu0 0
  %1368 = vmatprep.subr.bf16.mxu0 0
  %1369 = vmatpush2.bf16.msra.mxu0 0
  %1370 = vmatprep.subr.bf16.mxu0 0
  %1371 = vmatpush2.bf16.msra.mxu0 0
  %1372 = vmatprep.subr.bf16.mxu0 0
  %1373 = vmatpush2.bf16.msra.mxu0 0
  %1374 = vmatprep.subr.bf16.mxu0 0
  %1375 = vmatpush2.bf16.msra.mxu0 0
  %1376 = vmatprep.subr.bf16.mxu0 0
  %1377 = vmatpush2.bf16.msra.mxu0 0
  %1378 = vmatprep.mubr.bf16.mxu0 0
  %1379 = vmatmul.mubr.bf16.gmra.mxu0 %v1294
  %v1380 = vpop.f32.mrf.mxu0
  %v1381 = vadd.f32 0.0, %v1380
  %v1382 = vpop.f32.mrf.mxu0
  %v1383 = vpop.f32.mrf.mxu0
  %v1384 = vadd.f32 0.0, %v1383
  %v1385 = vpop.f32.mrf.mxu0
  %1386 = vmatprep.mubr.bf16.mxu0 0
  %1387 = vmatmul.mubr.bf16.gmra.mxu0 %v1295
  %v1388 = vpop.f32.mrf.mxu0
  %v1389 = vadd.f32 0.0, %v1388
  %v1390 = vpop.f32.mrf.mxu0
  %v1391 = vpop.f32.mrf.mxu0
  %v1392 = vadd.f32 0.0, %v1391
  %v1393 = vpop.f32.mrf.mxu0
  %1394 = vdwg.mxu0
  %v1395 = vadd.f32 %v1239, %v1381
  %v1396 = vadd.f32 %v1242, %v1384
  %v1397 = vadd.f32 %v1247, %v1389
  %v1398 = vadd.f32 %v1250, %v1392
  %v1399 = vadd.f32 %v1395, %v1396
  %v1400 = vadd.f32 %v1399, %v1397
  %v1401 = vadd.f32 %v1400, %v1398
  %v1402 = vrot.slane %v1401, 4
  %v1403 = vadd.f32 %v1401, %v1402
  %v1404 = vrot.slane %v1403, 2
  %v1405 = vadd.f32 %v1403, %v1404
  %v1406 = vrot.slane %v1405, 1
  %v1407 = vadd.f32 %v1405, %v1406
  %v1408 = vmul.f32 %v1395, %v1395
  %v1409 = vmul.f32 %v1396, %v1396
  %v1410 = vmul.f32 %v1397, %v1397
  %v1411 = vmul.f32 %v1398, %v1398
  %v1412 = vadd.f32 %v1408, %v1409
  %v1413 = vadd.f32 %v1412, %v1410
  %v1414 = vadd.f32 %v1413, %v1411
  %v1415 = vrot.slane %v1414, 4
  %v1416 = vadd.f32 %v1414, %v1415
  %v1417 = vrot.slane %v1416, 2
  %v1418 = vadd.f32 %v1416, %v1417
  %v1419 = vrot.slane %v1418, 1
  %v1420 = vadd.f32 %v1418, %v1419
  %v1421 = vadd.f32 %v1407, 0.0
  %v1422 = vadd.f32 %v1420, 0.0
  %1424 = vrot.lane.b32.xlu0 %v1407, 120
  %v1425 = vpop.permute.xlu0 %1424
  %v1427 = vadd.f32 %v1421, %v1425
  %1429 = vrot.lane.b32.xlu0 %v1420, 120
  %v1430 = vpop.permute.xlu0 %1429
  %v1432 = vadd.f32 %v1422, %v1430
  %1433 = vrot.lane.b32.xlu0 %v1407, 112
  %v1434 = vpop.permute.xlu0 %1433
  %v1436 = vadd.f32 %v1427, %v1434
  %1437 = vrot.lane.b32.xlu0 %v1420, 112
  %v1438 = vpop.permute.xlu0 %1437
  %v1440 = vadd.f32 %v1432, %v1438
  %1441 = vrot.lane.b32.xlu0 %v1407, 104
  %v1442 = vpop.permute.xlu0 %1441
  %v1444 = vadd.f32 %v1436, %v1442
  %1445 = vrot.lane.b32.xlu0 %v1420, 104
  %v1446 = vpop.permute.xlu0 %1445
  %v1448 = vadd.f32 %v1440, %v1446
  %1449 = vrot.lane.b32.xlu0 %v1407, 96
  %v1450 = vpop.permute.xlu0 %1449
  %v1452 = vadd.f32 %v1444, %v1450
  %1453 = vrot.lane.b32.xlu0 %v1420, 96
  %v1454 = vpop.permute.xlu0 %1453
  %v1456 = vadd.f32 %v1448, %v1454
  %1457 = vrot.lane.b32.xlu0 %v1407, 88
  %v1458 = vpop.permute.xlu0 %1457
  %v1460 = vadd.f32 %v1452, %v1458
  %1461 = vrot.lane.b32.xlu0 %v1420, 88
  %v1462 = vpop.permute.xlu0 %1461
  %v1464 = vadd.f32 %v1456, %v1462
  %1465 = vrot.lane.b32.xlu0 %v1407, 80
  %v1466 = vpop.permute.xlu0 %1465
  %v1468 = vadd.f32 %v1460, %v1466
  %1469 = vrot.lane.b32.xlu0 %v1420, 80
  %v1470 = vpop.permute.xlu0 %1469
  %v1472 = vadd.f32 %v1464, %v1470
  %1473 = vrot.lane.b32.xlu0 %v1407, 72
  %v1474 = vpop.permute.xlu0 %1473
  %v1476 = vadd.f32 %v1468, %v1474
  %1477 = vrot.lane.b32.xlu0 %v1420, 72
  %v1478 = vpop.permute.xlu0 %1477
  %v1480 = vadd.f32 %v1472, %v1478
  %1481 = vrot.lane.b32.xlu0 %v1407, 64
  %v1482 = vpop.permute.xlu0 %1481
  %v1484 = vadd.f32 %v1476, %v1482
  %1485 = vrot.lane.b32.xlu0 %v1420, 64
  %v1486 = vpop.permute.xlu0 %1485
  %v1488 = vadd.f32 %v1480, %v1486
  %1489 = vrot.lane.b32.xlu0 %v1407, 56
  %v1490 = vpop.permute.xlu0 %1489
  %v1492 = vadd.f32 %v1484, %v1490
  %1493 = vrot.lane.b32.xlu0 %v1420, 56
  %v1494 = vpop.permute.xlu0 %1493
  %v1496 = vadd.f32 %v1488, %v1494
  %1497 = vrot.lane.b32.xlu0 %v1407, 48
  %v1498 = vpop.permute.xlu0 %1497
  %v1500 = vadd.f32 %v1492, %v1498
  %1501 = vrot.lane.b32.xlu0 %v1420, 48
  %v1502 = vpop.permute.xlu0 %1501
  %v1504 = vadd.f32 %v1496, %v1502
  %1505 = vrot.lane.b32.xlu0 %v1407, 40
  %v1506 = vpop.permute.xlu0 %1505
  %v1508 = vadd.f32 %v1500, %v1506
  %1509 = vrot.lane.b32.xlu0 %v1420, 40
  %v1510 = vpop.permute.xlu0 %1509
  %v1512 = vadd.f32 %v1504, %v1510
  %1513 = vrot.lane.b32.xlu0 %v1407, 32
  %v1514 = vpop.permute.xlu0 %1513
  %v1516 = vadd.f32 %v1508, %v1514
  %1517 = vrot.lane.b32.xlu0 %v1420, 32
  %v1518 = vpop.permute.xlu0 %1517
  %v1520 = vadd.f32 %v1512, %v1518
  %1521 = vrot.lane.b32.xlu0 %v1407, 24
  %v1522 = vpop.permute.xlu0 %1521
  %v1524 = vadd.f32 %v1516, %v1522
  %1525 = vrot.lane.b32.xlu0 %v1420, 24
  %v1526 = vpop.permute.xlu0 %1525
  %v1528 = vadd.f32 %v1520, %v1526
  %1529 = vrot.lane.b32.xlu0 %v1407, 16
  %v1530 = vpop.permute.xlu0 %1529
  %v1532 = vadd.f32 %v1524, %v1530
  %1533 = vrot.lane.b32.xlu0 %v1420, 16
  %v1534 = vpop.permute.xlu0 %1533
  %v1536 = vadd.f32 %v1528, %v1534
  %1537 = vrot.lane.b32.xlu0 %v1407, 8
  %v1538 = vpop.permute.xlu0 %1537
  %v1540 = vadd.f32 %v1532, %v1538
  %1541 = vrot.lane.b32.xlu0 %v1420, 8
  %v1542 = vpop.permute.xlu0 %1541
  %v1544 = vadd.f32 %v1536, %v1542
  %v1545 = vmul.f32 %v1540, %v710
  %v1546 = vmul.f32 %v1544, %v710
  %v1547 = vmul.f32 %v1545, %v1545
  %v1548 = vsub.f32 %v1546, %v1547
  %v1549 = vld [vmem:[%s5] sm:$0x1]
  %v1550 = vadd.f32 %v1548, 1e-05
  %v1551 = vrsqrt.pop %v1550
  %v1552 = vmul.f32 %v1549, %v1551
  %v1553 = vld [vmem:[%s6] sm:$0x1]
  %v1554 = vmul.f32 %v1545, %v1552
  %v1555 = vsub.f32 %v1553, %v1554
  %v1557 = vlaneseq
  %v1558 = vshrl.u32 %v1557, 7
  %v1559 = vsub.s32 0, %v1558
  %v1560 = vrot.slane %v1552, %v1559
  %1561 = vrot.lane.b32.xlu0 %v1560, 8
  %v1562 = vpop.permute.xlu0 %1561
  %1564 = vrot.lane.b32.xlu0 %v1560, 16
  %v1565 = vpop.permute.xlu0 %1564
  %1567 = vrot.lane.b32.xlu0 %v1560, 24
  %v1568 = vpop.permute.xlu0 %1567
  %1570 = vrot.lane.b32.xlu0 %v1560, 32
  %v1571 = vpop.permute.xlu0 %1570
  %1573 = vrot.lane.b32.xlu0 %v1560, 40
  %v1574 = vpop.permute.xlu0 %1573
  %1576 = vrot.lane.b32.xlu0 %v1560, 48
  %v1577 = vpop.permute.xlu0 %1576
  %1579 = vrot.lane.b32.xlu0 %v1560, 56
  %v1580 = vpop.permute.xlu0 %1579
  %1582 = vrot.lane.b32.xlu0 %v1560, 64
  %v1583 = vpop.permute.xlu0 %1582
  %1585 = vrot.lane.b32.xlu0 %v1560, 72
  %v1586 = vpop.permute.xlu0 %1585
  %1588 = vrot.lane.b32.xlu0 %v1560, 80
  %v1589 = vpop.permute.xlu0 %1588
  %1591 = vrot.lane.b32.xlu0 %v1560, 88
  %v1592 = vpop.permute.xlu0 %1591
  %1594 = vrot.lane.b32.xlu0 %v1560, 96
  %v1595 = vpop.permute.xlu0 %1594
  %1597 = vrot.lane.b32.xlu0 %v1560, 104
  %v1598 = vpop.permute.xlu0 %1597
  %1600 = vrot.lane.b32.xlu0 %v1560, 112
  %v1601 = vpop.permute.xlu0 %1600
  %1603 = vrot.lane.b32.xlu0 %v1560, 120
  %v1604 = vpop.permute.xlu0 %1603
  %v1606 = vsel %vm772, %v1552, %v1562
  %v1607 = vsel %vm774, %v1606, %v1565
  %v1608 = vsel %vm776, %v1607, %v1568
  %v1609 = vsel %vm778, %v1608, %v1571
  %v1610 = vsel %vm780, %v1609, %v1574
  %v1611 = vsel %vm782, %v1610, %v1577
  %v1612 = vsel %vm784, %v1611, %v1580
  %v1613 = vsel %vm786, %v1612, %v1583
  %v1614 = vsel %vm788, %v1613, %v1586
  %v1615 = vsel %vm790, %v1614, %v1589
  %v1616 = vsel %vm792, %v1615, %v1592
  %v1617 = vsel %vm794, %v1616, %v1595
  %v1618 = vsel %vm796, %v1617, %v1598
  %v1619 = vsel %vm798, %v1618, %v1601
  %v1620 = vsel %vm800, %v1619, %v1604
  %v1622 = vlaneseq
  %v1623 = vshrl.u32 %v1622, 7
  %v1624 = vsub.s32 0, %v1623
  %v1625 = vrot.slane %v1555, %v1624
  %1626 = vrot.lane.b32.xlu0 %v1625, 8
  %v1627 = vpop.permute.xlu0 %1626
  %1629 = vrot.lane.b32.xlu0 %v1625, 16
  %v1630 = vpop.permute.xlu0 %1629
  %1632 = vrot.lane.b32.xlu0 %v1625, 24
  %v1633 = vpop.permute.xlu0 %1632
  %1635 = vrot.lane.b32.xlu0 %v1625, 32
  %v1636 = vpop.permute.xlu0 %1635
  %1638 = vrot.lane.b32.xlu0 %v1625, 40
  %v1639 = vpop.permute.xlu0 %1638
  %1641 = vrot.lane.b32.xlu0 %v1625, 48
  %v1642 = vpop.permute.xlu0 %1641
  %1644 = vrot.lane.b32.xlu0 %v1625, 56
  %v1645 = vpop.permute.xlu0 %1644
  %1647 = vrot.lane.b32.xlu0 %v1625, 64
  %v1648 = vpop.permute.xlu0 %1647
  %1650 = vrot.lane.b32.xlu0 %v1625, 72
  %v1651 = vpop.permute.xlu0 %1650
  %1653 = vrot.lane.b32.xlu0 %v1625, 80
  %v1654 = vpop.permute.xlu0 %1653
  %1656 = vrot.lane.b32.xlu0 %v1625, 88
  %v1657 = vpop.permute.xlu0 %1656
  %1659 = vrot.lane.b32.xlu0 %v1625, 96
  %v1660 = vpop.permute.xlu0 %1659
  %1662 = vrot.lane.b32.xlu0 %v1625, 104
  %v1663 = vpop.permute.xlu0 %1662
  %1665 = vrot.lane.b32.xlu0 %v1625, 112
  %v1666 = vpop.permute.xlu0 %1665
  %1668 = vrot.lane.b32.xlu0 %v1625, 120
  %v1669 = vpop.permute.xlu0 %1668
  %v1671 = vsel %vm772, %v1555, %v1627
  %v1672 = vsel %vm774, %v1671, %v1630
  %v1673 = vsel %vm776, %v1672, %v1633
  %v1674 = vsel %vm778, %v1673, %v1636
  %v1675 = vsel %vm780, %v1674, %v1639
  %v1676 = vsel %vm782, %v1675, %v1642
  %v1677 = vsel %vm784, %v1676, %v1645
  %v1678 = vsel %vm786, %v1677, %v1648
  %v1679 = vsel %vm788, %v1678, %v1651
  %v1680 = vsel %vm790, %v1679, %v1654
  %v1681 = vsel %vm792, %v1680, %v1657
  %v1682 = vsel %vm794, %v1681, %v1660
  %v1683 = vsel %vm796, %v1682, %v1663
  %v1684 = vsel %vm798, %v1683, %v1666
  %v1685 = vsel %vm800, %v1684, %v1669
  %v1686 = vlaneseq
  %v1687 = vshrl.u32 %v1686, 7
  %v1688 = vsub.s32 0, %v1687
  %v1689 = vrot.slane %v1620, %v1688
  %v1690 = vmul.f32 %v1395, %v1689
  %v1691 = vmul.f32 %v1396, %v1689
  %v1692 = vmul.f32 %v1397, %v1689
  %v1693 = vmul.f32 %v1398, %v1689
  %v1694 = vlaneseq
  %v1695 = vshrl.u32 %v1694, 7
  %v1696 = vsub.s32 0, %v1695
  %v1697 = vrot.slane %v1685, %v1696
  %v1698 = vadd.f32 %v1690, %v1697
  %v1699 = vadd.f32 %v1691, %v1697
  %v1700 = vadd.f32 %v1692, %v1697
  %v1701 = vadd.f32 %v1693, %v1697
  %v1702 = vld [vmem:[%s0] sm:$0xff]
  %v1703 = vld [vmem:[%s0 + $0x8] sm:$0xff]
  %v1704 = vld [vmem:[%s0 + $0x10] sm:$0xff]
  %v1705 = vld [vmem:[%s0 + $0x18] sm:$0xff]
  %v1706 = vadd.f32 %v1698, %v1702
  %v1707 = vadd.f32 %v1699, %v1703
  %v1708 = vadd.f32 %v1700, %v1704
  %v1709 = vadd.f32 %v1701, %v1705
  %v1710 = vmax.f32 %v1706, 0.0
  %v1711 = vmax.f32 %v1707, 0.0
  %v1712 = vmax.f32 %v1708, 0.0
  %v1713 = vmax.f32 %v1709, 0.0
  %1714 = vst [vmem:[%s7] sm:$0xff] %v1710
  %1715 = vst [vmem:[%s7 + $0x8] sm:$0xff] %v1711
  %1716 = vst [vmem:[%s7 + $0x10] sm:$0xff] %v1712
  %1717 = vst [vmem:[%s7 + $0x18] sm:$0xff] %v1713
  // Predicated region
  $region30: #{basic_block.1} parent=0 // pred_check
    _
  $region31: #{basic_block.1} parent=0 // pred_check_branch
    %1719 = sbr.rel (0) target = $region33
  $region32: #{basic_block.1} parent=0 // pred_region
    _
  $region33: #{basic_block.1} parent=0 // pred_fallthru
    _
  // Predicated region
  $region34: #{basic_block.1} parent=0 // pred_check
    _
  $region35: #{basic_block.1} parent=0 // pred_check_branch
    %1721 = sbr.rel (0) target = $region37
  $region36: #{basic_block.1} parent=0 // pred_region
    _
  $region37: #{basic_block.1} parent=0 // pred_fallthru
    _

</llo_original>
